<compile_context>
chip_gen: v5e
topology: v5e:2x2
jax: 0.10.0
libtpu: 0.0.40
codegen_flags: <defaults>
</compile_context>

<pallas_src>
import functools
import math

import jax
import jax.numpy as jnp
from jax import lax
from jax.experimental import pallas as pl
from jax.experimental.pallas import tpu as pltpu

LN_EPS = 1e-5  # torch nn.LayerNorm default
_SQRT_2_OVER_PI = math.sqrt(2.0 / math.pi)


def _gelu_tanh(x):
    # tanh-approximate GELU: routes the transcendental through the EUP slot instead of a
    # ~dozen-op f32 erf polynomial on the VALU. |delta| vs exact-erf GELU <= ~3e-4.
    return 0.5 * x * (1.0 + jnp.tanh(_SQRT_2_OVER_PI * (x + 0.044715 * x * x * x)))


def _layernorm_masked(x, gamma, beta, mask, inv_n):
    """LayerNorm over the last axis counting only the first `valid_s` lanes.

    NOTE: the unmasked mean-sum relies on the padded lanes of `x` being exactly zero,
    which is guaranteed because the padded weight columns AND the padded bias/gamma/beta
    lanes are zero-padded in the wrapper.  Keep that invariant if padding changes.
    """
    mean = jnp.sum(x, axis=-1, keepdims=True) * inv_n
    centered = jnp.where(mask, x - mean, 0.0)
    var = jnp.sum(centered * centered, axis=-1, keepdims=True) * inv_n
    inv = lax.rsqrt(var + LN_EPS)
    return centered * inv * gamma + beta


def residual_block_kernel(x_ref, w1_ref, w2_ref, p_ref, o_ref, *, valid_s):
    sp = x_ref.shape[-1]
    lane = lax.broadcasted_iota(jnp.int32, (1, sp), 1)
    mask = lane < valid_s
    inv_n = 1.0 / float(valid_s)

    # Packed LN/bias params, rows of an (8, Sp) f32 block: [b1, g1, beta1, b2, g2, beta2, 0, 0]
    b1, g1, be1 = p_ref[0:1, :], p_ref[1:2, :], p_ref[2:3, :]
    b2, g2, be2 = p_ref[3:4, :], p_ref[4:5, :], p_ref[5:6, :]

    x_f32 = x_ref[...]                      # (TM, Sp) f32; residual kept at full precision

    # fc1: activations cast to bf16 in-tile (cast hides under the MXU), f32 accumulation.
    h = jnp.dot(x_f32.astype(jnp.bfloat16), w1_ref[...],
                preferred_element_type=jnp.float32) + b1
    h = _layernorm_masked(h, g1, be1, mask, inv_n)
    h = _gelu_tanh(h)
    # dropout: identity in eval mode.
    # TODO(synk): training-mode dropout mask (pltpu.prng_random_bits) not implemented.

    # fc2
    h = jnp.dot(h.astype(jnp.bfloat16), w2_ref[...],
                preferred_element_type=jnp.float32) + b2
    h = _layernorm_masked(h, g2, be2, mask, inv_n)

    # residual add (f32) + final GELU.
    # TODO(synk): optional bf16 epilogue for v6e/v7x (kept f32 here for v5e + precision).
    o_ref[...] = _gelu_tanh(h + x_f32).astype(o_ref.dtype)


def _choose_tile_m(batch, tm):
    """Row-tile size: MXU wants M >= 128; never shrink the tile to round8(B).

    For batches larger than one tile, prefer >= 2 grid steps so v7x's two
    TensorCores both get work ("parallel" axis sharding)."""
    tm = max(128, (tm // 128) * 128)
    if batch <= 128:
        return 128
    if batch <= tm:
        half = ((batch + 1) // 2 + 127) // 128 * 128
        return max(128, min(tm, half))
    return tm


def residual_block(x, params, *, tm=256):
    """x: (B, S) float32. params: w1,b1,g1,beta1,w2,b2,g2,beta2 (w pre-transposed to (S,S))."""
    B, S = x.shape

    Sp = ((S + 127) // 128) * 128           # lane-dense feature dim
    TM = _choose_tile_m(B, tm)
    Bp = ((B + TM - 1) // TM) * TM

    def pad2(a, rows, cols):
        return jnp.pad(a, ((0, rows - a.shape[0]), (0, cols - a.shape[1])))

    # Keep x in f32 (no separate bf16 cast pass over HBM); cast to bf16 inside the tile.
    xp = pad2(x, Bp, Sp)
    w1 = pad2(params["w1"], Sp, Sp).astype(jnp.bfloat16)
    w2 = pad2(params["w2"], Sp, Sp).astype(jnp.bfloat16)
    # Pack the six LN/bias vectors into one (8, Sp) f32 block (zero-padded lanes keep the
    # masked-LayerNorm invariant: padded lanes of fc outputs stay exactly zero).
    pvec = jnp.stack([params["b1"], params["g1"], params["beta1"],
                      params["b2"], params["g2"], params["beta2"]], axis=0).astype(jnp.float32)
    pvec = jnp.pad(pvec, ((0, 8 - pvec.shape[0]), (0, Sp - S)))

    kernel = functools.partial(residual_block_kernel, valid_s=S)

    row_spec = pl.BlockSpec((TM, Sp), lambda i: (i, 0))             # pipelined over batch rows
    # Resident blocks (constant index_map): single-buffer them so the two (Sp,Sp) bf16
    # weights cost 2*Sp^2*2 B of VMEM, not 4*Sp^2*2 B.
    resident = lambda shape: pl.BlockSpec(shape, lambda i: (0, 0),
                                          pipeline_mode=pl.Buffered(1))

    # Scheduling hint for XLA around the custom call.
    cost = pl.CostEstimate(
        flops=2 * 2 * Bp * Sp * Sp,
        transcendentals=2 * Bp * Sp,
        bytes_accessed=(Bp * Sp * 4          # x (f32 in)
                        + 2 * Sp * Sp * 2    # weights (bf16)
                        + 8 * Sp * 4         # packed LN params
                        + Bp * Sp * 4),      # out (f32)
    )

    # VMEM budget: single-buffered resident weights/params + double-buffered f32 x/out
    # tiles + rough allowance for in-kernel f32 intermediates.
    vmem_need = (2 * Sp * Sp * 2
                 + 8 * Sp * 4
                 + 2 * TM * Sp * 4
                 + 2 * TM * Sp * 4
                 + 4 * TM * Sp * 4)
    try:
        phys_vmem = pltpu.get_tpu_info().vmem_capacity_bytes
    except Exception:
        phys_vmem = 64 * 1024 * 1024         # conservative: v7x has 64 MiB per TC
    vmem_cap = int(phys_vmem * 0.75)         # ~25% headroom for Mosaic internal scratch
    vmem_limit = int(min(max(2 * vmem_need, 32 * 1024 * 1024), vmem_cap))
    # TODO(synk): for Sp ~>= 2048 on v7x (64 MiB/TC) stream W1 (N-tiles) / W2 (K-tiles)
    # via an inner "arbitrary" grid axis instead of keeping both weights fully resident.

    out = pl.pallas_call(
        kernel,
        out_shape=jax.ShapeDtypeStruct((Bp, Sp), jnp.float32),
        grid_spec=pltpu.PrefetchScalarGridSpec(
            num_scalar_prefetch=0,
            grid=(Bp // TM,),
            in_specs=[
                row_spec,                 # x (f32)
                resident((Sp, Sp)),       # W1 (bf16)
                resident((Sp, Sp)),       # W2 (bf16)
                resident((8, Sp)),        # packed b1,g1,beta1,b2,g2,beta2 (f32)
            ],
            out_specs=row_spec,
        ),
        compiler_params=pltpu.CompilerParams(
            dimension_semantics=("parallel",),
            vmem_limit_bytes=vmem_limit,
        ),
        cost_estimate=cost,
    )(xp, w1, w2, pvec)

    return out[:B, :S]


def residual_block_ref(x, params):
    """Pure-JAX f32 reference (exact-erf GELU, matching torch) for validation."""
    def ln(v, g, b):
        m = jnp.mean(v, axis=-1, keepdims=True)
        c = v - m
        var = jnp.mean(c * c, axis=-1, keepdims=True)
        return c * lax.rsqrt(var + LN_EPS) * g + b

    gelu = lambda v: 0.5 * v * (1.0 + lax.erf(v / math.sqrt(2.0)))

    out = x @ params["w1"] + params["b1"]
    out = gelu(ln(out, params["g1"], params["beta1"]))
    out = out @ params["w2"] + params["b2"]
    out = ln(out, params["g2"], params["beta2"]) + x
    return gelu(out)


def make_params(key, size):
    k1, k2, k3, k4 = jax.random.split(key, 4)
    bound = 1.0 / math.sqrt(size)  # torch nn.Linear default init range
    return {
        "w1": jax.random.uniform(k1, (size, size), jnp.float32, -bound, bound),
        "b1": jax.random.uniform(k2, (size,), jnp.float32, -bound, bound),
        "g1": jnp.ones((size,), jnp.float32),
        "beta1": jnp.zeros((size,), jnp.float32),
        "w2": jax.random.uniform(k3, (size, size), jnp.float32, -bound, bound),
        "b2": jax.random.uniform(k4, (size,), jnp.float32, -bound, bound),
        "g2": jnp.ones((size,), jnp.float32),
        "beta2": jnp.zeros((size,), jnp.float32),
    }


if __name__ == "__main__":
    key = jax.random.PRNGKey(0)
    kx, kp = jax.random.split(key)

    B, S = 8, 32  # small shapes: batch=8, hidden size=32
    x = jax.random.normal(kx, (B, S), jnp.float32)
    params = make_params(kp, S)

    out = residual_block(x, params)
    out = jax.block_until_ready(out)

    ref = residual_block_ref(x, params)
    assert out.shape == (B, S)
    # bf16 MXU operands + tanh-approx GELU vs exact-erf f32 reference -> relaxed tolerance.
    assert jnp.allclose(out, ref, atol=3e-2, rtol=3e-2), "mismatch vs reference"

    print("KERNEL_OK")
</pallas_src>

<mosaic_0001>
module attributes {stable_mosaic.version = 11 : i64} {
  func.func @residual_block_kernel(%arg0: i32, %arg1: memref<128x128xf32, #tpu.memory_space<vmem>>, %arg2: memref<128x128xbf16, #tpu.memory_space<vmem>>, %arg3: memref<128x128xbf16, #tpu.memory_space<vmem>>, %arg4: memref<8x128xf32, #tpu.memory_space<vmem>>, %arg5: memref<128x128xf32, #tpu.memory_space<vmem>>) attributes {dimension_semantics = [#tpu.dimension_semantics<parallel>], iteration_bounds = array<i64: 1>, scalar_prefetch = 0 : i64, scratch_operands = 0 : i64, tpu.core_type = #tpu.core_type<tc>, window_params = [{transform_indices = @transform_0, window_bounds = array<i64: 128, 128>}, {pipeline_mode = #tpu.pipeline_mode<synchronous>, transform_indices = @transform_1, window_bounds = array<i64: 128, 128>}, {pipeline_mode = #tpu.pipeline_mode<synchronous>, transform_indices = @transform_2, window_bounds = array<i64: 128, 128>}, {pipeline_mode = #tpu.pipeline_mode<synchronous>, transform_indices = @transform_3, window_bounds = array<i64: 8, 128>}, {transform_indices = @transform_4, window_bounds = array<i64: 128, 128>}]} {
    %0 = tpu.iota {dimensions = array<i32: 1>} : vector<1x128xi32>
    %c32_i32 = arith.constant 32 : i32
    %1 = vector.broadcast %c32_i32 : i32 to vector<1x128xi32>
    %2 = arith.cmpi slt, %0, %1 : vector<1x128xi32>
    %c0 = arith.constant 0 : index
    %c0_0 = arith.constant 0 : index
    %3 = vector.load %arg4[%c0, %c0_0] : memref<8x128xf32, #tpu.memory_space<vmem>>, vector<1x128xf32>
    %c1 = arith.constant 1 : index
    %c0_1 = arith.constant 0 : index
    %4 = vector.load %arg4[%c1, %c0_1] : memref<8x128xf32, #tpu.memory_space<vmem>>, vector<1x128xf32>
    %c2 = arith.constant 2 : index
    %c0_2 = arith.constant 0 : index
    %5 = vector.load %arg4[%c2, %c0_2] : memref<8x128xf32, #tpu.memory_space<vmem>>, vector<1x128xf32>
    %c3 = arith.constant 3 : index
    %c0_3 = arith.constant 0 : index
    %6 = vector.load %arg4[%c3, %c0_3] : memref<8x128xf32, #tpu.memory_space<vmem>>, vector<1x128xf32>
    %c4 = arith.constant 4 : index
    %c0_4 = arith.constant 0 : index
    %7 = vector.load %arg4[%c4, %c0_4] : memref<8x128xf32, #tpu.memory_space<vmem>>, vector<1x128xf32>
    %c5 = arith.constant 5 : index
    %c0_5 = arith.constant 0 : index
    %8 = vector.load %arg4[%c5, %c0_5] : memref<8x128xf32, #tpu.memory_space<vmem>>, vector<1x128xf32>
    %c0_6 = arith.constant 0 : index
    %c0_7 = arith.constant 0 : index
    %9 = vector.load %arg1[%c0_6, %c0_7] : memref<128x128xf32, #tpu.memory_space<vmem>>, vector<128x128xf32>
    %10 = arith.truncf %9 : vector<128x128xf32> to vector<128x128xbf16>
    %c0_8 = arith.constant 0 : index
    %c0_9 = arith.constant 0 : index
    %11 = vector.load %arg2[%c0_8, %c0_9] : memref<128x128xbf16, #tpu.memory_space<vmem>>, vector<128x128xbf16>
    %cst = arith.constant dense<0.000000e+00> : vector<128x128xf32>
    %12 = tpu.matmul %10, %11, %cst {dimension_numbers = #tpu.dot_dimension_numbers<[1], [0], [0], [1], [0, 0, 1, 1], [], []>} : vector<128x128xbf16>, vector<128x128xbf16>, vector<128x128xf32> -> vector<128x128xf32>
    %13 = vector.broadcast %3 : vector<1x128xf32> to vector<128x128xf32>
    %14 = arith.addf %12, %13 : vector<128x128xf32>
    %cst_10 = arith.constant dense<0.000000e+00> : vector<128xf32>
    %15 = vector.multi_reduction <add>, %14, %cst_10 [1] : vector<128x128xf32> to vector<128xf32>
    %16 = vector.shape_cast %15 : vector<128xf32> to vector<128x1xf32>
    %cst_11 = arith.constant 3.125000e-02 : f32
    %17 = vector.broadcast %cst_11 : f32 to vector<128x1xf32>
    %18 = arith.mulf %16, %17 : vector<128x1xf32>
    %19 = vector.broadcast %18 : vector<128x1xf32> to vector<128x128xf32>
    %20 = arith.subf %14, %19 : vector<128x128xf32>
    %cst_12 = arith.constant 0.000000e+00 : f32
    %21 = vector.shape_cast %2 : vector<1x128xi1> to vector<1x128xi1>
    %22 = vector.broadcast %21 : vector<1x128xi1> to vector<128x128xi1>
    %23 = vector.broadcast %cst_12 : f32 to vector<128x128xf32>
    %24 = arith.select %22, %20, %23 : vector<128x128xi1>, vector<128x128xf32>
    %25 = arith.mulf %24, %24 : vector<128x128xf32>
    %cst_13 = arith.constant dense<0.000000e+00> : vector<128xf32>
    %26 = vector.multi_reduction <add>, %25, %cst_13 [1] : vector<128x128xf32> to vector<128xf32>
    %27 = vector.shape_cast %26 : vector<128xf32> to vector<128x1xf32>
    %cst_14 = arith.constant 3.125000e-02 : f32
    %28 = vector.broadcast %cst_14 : f32 to vector<128x1xf32>
    %29 = arith.mulf %27, %28 : vector<128x1xf32>
    %cst_15 = arith.constant 9.99999974E-6 : f32
    %30 = vector.broadcast %cst_15 : f32 to vector<128x1xf32>
    %31 = arith.addf %29, %30 : vector<128x1xf32>
    %32 = math.rsqrt %31 : vector<128x1xf32>
    %33 = vector.broadcast %32 : vector<128x1xf32> to vector<128x128xf32>
    %34 = arith.mulf %24, %33 : vector<128x128xf32>
    %35 = vector.broadcast %4 : vector<1x128xf32> to vector<128x128xf32>
    %36 = arith.mulf %34, %35 : vector<128x128xf32>
    %37 = vector.broadcast %5 : vector<1x128xf32> to vector<128x128xf32>
    %38 = arith.addf %36, %37 : vector<128x128xf32>
    %cst_16 = arith.constant 5.000000e-01 : f32
    %39 = vector.broadcast %cst_16 : f32 to vector<128x128xf32>
    %40 = arith.mulf %39, %38 : vector<128x128xf32>
    %cst_17 = arith.constant 4.471500e-02 : f32
    %41 = vector.broadcast %cst_17 : f32 to vector<128x128xf32>
    %42 = arith.mulf %41, %38 : vector<128x128xf32>
    %43 = arith.mulf %42, %38 : vector<128x128xf32>
    %44 = arith.mulf %43, %38 : vector<128x128xf32>
    %45 = arith.addf %38, %44 : vector<128x128xf32>
    %cst_18 = arith.constant 0.797884583 : f32
    %46 = vector.broadcast %cst_18 : f32 to vector<128x128xf32>
    %47 = arith.mulf %46, %45 : vector<128x128xf32>
    %48 = math.tanh %47 : vector<128x128xf32>
    %cst_19 = arith.constant 1.000000e+00 : f32
    %49 = vector.broadcast %cst_19 : f32 to vector<128x128xf32>
    %50 = arith.addf %49, %48 : vector<128x128xf32>
    %51 = arith.mulf %40, %50 : vector<128x128xf32>
    %52 = arith.truncf %51 : vector<128x128xf32> to vector<128x128xbf16>
    %c0_20 = arith.constant 0 : index
    %c0_21 = arith.constant 0 : index
    %53 = vector.load %arg3[%c0_20, %c0_21] : memref<128x128xbf16, #tpu.memory_space<vmem>>, vector<128x128xbf16>
    %cst_22 = arith.constant dense<0.000000e+00> : vector<128x128xf32>
    %54 = tpu.matmul %52, %53, %cst_22 {dimension_numbers = #tpu.dot_dimension_numbers<[1], [0], [0], [1], [0, 0, 1, 1], [], []>} : vector<128x128xbf16>, vector<128x128xbf16>, vector<128x128xf32> -> vector<128x128xf32>
    %55 = vector.broadcast %6 : vector<1x128xf32> to vector<128x128xf32>
    %56 = arith.addf %54, %55 : vector<128x128xf32>
    %cst_23 = arith.constant dense<0.000000e+00> : vector<128xf32>
    %57 = vector.multi_reduction <add>, %56, %cst_23 [1] : vector<128x128xf32> to vector<128xf32>
    %58 = vector.shape_cast %57 : vector<128xf32> to vector<128x1xf32>
    %cst_24 = arith.constant 3.125000e-02 : f32
    %59 = vector.broadcast %cst_24 : f32 to vector<128x1xf32>
    %60 = arith.mulf %58, %59 : vector<128x1xf32>
    %61 = vector.broadcast %60 : vector<128x1xf32> to vector<128x128xf32>
    %62 = arith.subf %56, %61 : vector<128x128xf32>
    %cst_25 = arith.constant 0.000000e+00 : f32
    %63 = vector.shape_cast %2 : vector<1x128xi1> to vector<1x128xi1>
    %64 = vector.broadcast %63 : vector<1x128xi1> to vector<128x128xi1>
    %65 = vector.broadcast %cst_25 : f32 to vector<128x128xf32>
    %66 = arith.select %64, %62, %65 : vector<128x128xi1>, vector<128x128xf32>
    %67 = arith.mulf %66, %66 : vector<128x128xf32>
    %cst_26 = arith.constant dense<0.000000e+00> : vector<128xf32>
    %68 = vector.multi_reduction <add>, %67, %cst_26 [1] : vector<128x128xf32> to vector<128xf32>
    %69 = vector.shape_cast %68 : vector<128xf32> to vector<128x1xf32>
    %cst_27 = arith.constant 3.125000e-02 : f32
    %70 = vector.broadcast %cst_27 : f32 to vector<128x1xf32>
    %71 = arith.mulf %69, %70 : vector<128x1xf32>
    %cst_28 = arith.constant 9.99999974E-6 : f32
    %72 = vector.broadcast %cst_28 : f32 to vector<128x1xf32>
    %73 = arith.addf %71, %72 : vector<128x1xf32>
    %74 = math.rsqrt %73 : vector<128x1xf32>
    %75 = vector.broadcast %74 : vector<128x1xf32> to vector<128x128xf32>
    %76 = arith.mulf %66, %75 : vector<128x128xf32>
    %77 = vector.broadcast %7 : vector<1x128xf32> to vector<128x128xf32>
    %78 = arith.mulf %76, %77 : vector<128x128xf32>
    %79 = vector.broadcast %8 : vector<1x128xf32> to vector<128x128xf32>
    %80 = arith.addf %78, %79 : vector<128x128xf32>
    %81 = arith.addf %80, %9 : vector<128x128xf32>
    %cst_29 = arith.constant 5.000000e-01 : f32
    %82 = vector.broadcast %cst_29 : f32 to vector<128x128xf32>
    %83 = arith.mulf %82, %81 : vector<128x128xf32>
    %cst_30 = arith.constant 4.471500e-02 : f32
    %84 = vector.broadcast %cst_30 : f32 to vector<128x128xf32>
    %85 = arith.mulf %84, %81 : vector<128x128xf32>
    %86 = arith.mulf %85, %81 : vector<128x128xf32>
    %87 = arith.mulf %86, %81 : vector<128x128xf32>
    %88 = arith.addf %81, %87 : vector<128x128xf32>
    %cst_31 = arith.constant 0.797884583 : f32
    %89 = vector.broadcast %cst_31 : f32 to vector<128x128xf32>
    %90 = arith.mulf %89, %88 : vector<128x128xf32>
    %91 = math.tanh %90 : vector<128x128xf32>
    %cst_32 = arith.constant 1.000000e+00 : f32
    %92 = vector.broadcast %cst_32 : f32 to vector<128x128xf32>
    %93 = arith.addf %92, %91 : vector<128x128xf32>
    %94 = arith.mulf %83, %93 : vector<128x128xf32>
    %c0_33 = arith.constant 0 : index
    %c0_34 = arith.constant 0 : index
    %95 = vector.load %arg5[%c0_33, %c0_34] : memref<128x128xf32, #tpu.memory_space<vmem>>, vector<128x128xf32>
    tpu.vector_store %arg5[%c0_33, %c0_34], %94 {strides = array<i32>} : memref<128x128xf32, #tpu.memory_space<vmem>>, vector<128x128xf32>,
    return
  }
  func.func @transform_0(%arg0: i32) -> (i32, i32) {
    %c0_i32 = arith.constant 0 : i32
    %c0_i32_0 = arith.constant 0 : i32
    return %arg0, %c0_i32 : i32, i32
  }
  func.func @transform_1(%arg0: i32) -> (i32, i32) {
    %c0_i32 = arith.constant 0 : i32
    %c0_i32_0 = arith.constant 0 : i32
    %c0_i32_1 = arith.constant 0 : i32
    return %c0_i32, %c0_i32_0 : i32, i32
  }
  func.func @transform_2(%arg0: i32) -> (i32, i32) {
    %c0_i32 = arith.constant 0 : i32
    %c0_i32_0 = arith.constant 0 : i32
    %c0_i32_1 = arith.constant 0 : i32
    return %c0_i32, %c0_i32_0 : i32, i32
  }
  func.func @transform_3(%arg0: i32) -> (i32, i32) {
    %c0_i32 = arith.constant 0 : i32
    %c0_i32_0 = arith.constant 0 : i32
    %c0_i32_1 = arith.constant 0 : i32
    return %c0_i32, %c0_i32_0 : i32, i32
  }
  func.func @transform_4(%arg0: i32) -> (i32, i32) {
    %c0_i32 = arith.constant 0 : i32
    %c0_i32_0 = arith.constant 0 : i32
    return %arg0, %c0_i32 : i32, i32
  }
}

</mosaic_0001>

<llo_original>
// kernel: tpu_custom_call.1
$region0: #{tpu_custom_call.1}
  #allocation0 [shape = 'u32[]', space=smem, size = 0x4, offset = 0x4, fixed_abs, tag = 'smem constant byte address 0x4 - core index']
  #allocation1 [shape = 'u32[72,128]{1,0:T(1,128)}', space=vmem, size = 0x9000, scoped, tag = 'internal scratch']
  %s0 = inlined_call_operand.hbm [shape: f32[128,128], index: 0, kind: input, shape index: {}]
  %s1 = inlined_call_operand.hbm [shape: bf16[128,128], index: 1, kind: input, shape index: {}]
  %s2 = inlined_call_operand.hbm [shape: bf16[128,128], index: 2, kind: input, shape index: {}]
  %s3 = inlined_call_operand.hbm [shape: f32[8,128], index: 3, kind: input, shape index: {}]
  %s4 = inlined_call_operand.hbm [shape: f32[128,128], index: 4, kind: output, shape index: {}]
  %s5 = sld [smem:[#allocation0]]
  $region42: #{tpu_custom_call.1} parent=0
    _
  %s7 = ssub.s32 1, %s5
  %s8 = scalar_select 0, %s7, %s5
  $region1: #{tpu_custom_call.1} parent=0
    #allocation2 [shape = 'u8[65536]{0}', space=vmem, size = 0x10000, scoped, tag = 'input window, operand 0, single buffered']
    #allocation3 [shape = 's32[1]{0}', space=sflag, size = 0x4, scoped, tag = 'scoped memory for tpu_custom_call.1']
    #allocation4 [shape = 's32[1]{0}', space=sflag, size = 0x4, scoped, tag = 'scoped memory for tpu_custom_call.1']
    #allocation5 [shape = 'u8[32768]{0}', space=vmem, size = 0x8000, scoped, tag = 'input window, operand 1, single buffered']
    #allocation6 [shape = 's32[1]{0}', space=sflag, size = 0x4, scoped, tag = 'scoped memory for tpu_custom_call.1']
    #allocation7 [shape = 'u8[32768]{0}', space=vmem, size = 0x8000, scoped, tag = 'input window, operand 2, single buffered']
    #allocation8 [shape = 'u8[4096]{0}', space=vmem, size = 0x1000, scoped, tag = 'input window, operand 3, single buffered']
    #allocation9 [shape = 's32[1]{0}', space=sflag, size = 0x4, scoped, tag = 'scoped memory for tpu_custom_call.1']
    #allocation10 [shape = 'u8[65536]{0}', space=vmem, size = 0x10000, scoped, tag = 'output window, operand 0, single buffered']
    %9 = vsyncpa [#allocation3], 0
    %10 = vsyncpa [#allocation6], 0
    %11 = vsyncpa [#allocation9], 0
    %12 = vsyncpa [#allocation4], 0
    // Predicated region
    $region2: #{tpu_custom_call.1} parent=1 // pred_check
      _
    $region3: #{tpu_custom_call.1} parent=1 // pred_check_branch
      %14 = sbr.rel (0) target = $region5
    $region4: #{tpu_custom_call.1} parent=1 // pred_region
      %16 = vsyncadd [#allocation3], 0
      %s17 = sshll.u32 %s0, 4
      %s18 = int_to_ptr.hbm [resolvable:$true] %s17
      %s19 = sshll.u32 [#allocation2], 4
      %s20 = int_to_ptr.vmem [resolvable:$true] %s19
      %25 = dma.hbm_to_vmem [thread:$0]  %s18, 2048, %s20, [#allocation3], 128, 128, 8
    $region5: #{tpu_custom_call.1} parent=1 // pred_fallthru
      _
    // Predicated region
    $region6: #{tpu_custom_call.1} parent=1 // pred_check
      _
    $region7: #{tpu_custom_call.1} parent=1 // pred_check_branch
      %27 = sbr.rel (0) target = $region9
    $region8: #{tpu_custom_call.1} parent=1 // pred_region
      %29 = vsyncadd [#allocation6], 0
      %s30 = sshll.u32 %s1, 4
      %s31 = int_to_ptr.hbm [resolvable:$true] %s30
      %s32 = sshll.u32 [#allocation5], 4
      %s33 = int_to_ptr.vmem [resolvable:$true] %s32
      %38 = dma.hbm_to_vmem [thread:$0]  %s31, 1024, %s33, [#allocation6], 64, 64, 4
    $region9: #{tpu_custom_call.1} parent=1 // pred_fallthru
      _
    // Predicated region
    $region10: #{tpu_custom_call.1} parent=1 // pred_check
      _
    $region11: #{tpu_custom_call.1} parent=1 // pred_check_branch
      %40 = sbr.rel (0) target = $region13
    $region12: #{tpu_custom_call.1} parent=1 // pred_region
      %42 = vsyncadd [#allocation6], 0
      %s43 = sshll.u32 %s2, 4
      %s44 = int_to_ptr.hbm [resolvable:$true] %s43
      %s45 = sshll.u32 [#allocation7], 4
      %s46 = int_to_ptr.vmem [resolvable:$true] %s45
      %51 = dma.hbm_to_vmem [thread:$0]  %s44, 1024, %s46, [#allocation6], 64, 64, 4
    $region13: #{tpu_custom_call.1} parent=1 // pred_fallthru
      _
    // Predicated region
    $region14: #{tpu_custom_call.1} parent=1 // pred_check
      _
    $region15: #{tpu_custom_call.1} parent=1 // pred_check_branch
      %53 = sbr.rel (0) target = $region17
    $region16: #{tpu_custom_call.1} parent=1 // pred_region
      %55 = vsyncadd [#allocation9], 0
      %s57 = sshll.u32 %s3, 4
      %s58 = int_to_ptr.hbm [resolvable:$true] %s57
      %s59 = sshll.u32 [#allocation8], 4
      %s60 = int_to_ptr.vmem [resolvable:$true] %s59
      %62 = dma.hbm_to_vmem [thread:$0]  %s58, 128, %s60, [#allocation9]
    $region17: #{tpu_custom_call.1} parent=1 // pred_fallthru
      _
    // Predicated region
    $region18: #{tpu_custom_call.1} parent=1 // pred_check
      _
    $region19: #{tpu_custom_call.1} parent=1 // pred_check_branch
      %64 = sbr.rel (0) target = $region21
    $region20: #{tpu_custom_call.1} parent=1 // pred_region
      %66 = dma.done [#allocation3], 2048
    $region21: #{tpu_custom_call.1} parent=1 // pred_fallthru
      _
    // Predicated region
    $region22: #{tpu_custom_call.1} parent=1 // pred_check
      _
    $region23: #{tpu_custom_call.1} parent=1 // pred_check_branch
      %68 = sbr.rel (0) target = $region25
    $region24: #{tpu_custom_call.1} parent=1 // pred_region
      %70 = dma.done [#allocation6], 1024
    $region25: #{tpu_custom_call.1} parent=1 // pred_fallthru
      _
    // Predicated region
    $region26: #{tpu_custom_call.1} parent=1 // pred_check
      _
    $region27: #{tpu_custom_call.1} parent=1 // pred_check_branch
      %72 = sbr.rel (0) target = $region29
    $region28: #{tpu_custom_call.1} parent=1 // pred_region
      %74 = dma.done [#allocation6], 1024
    $region29: #{tpu_custom_call.1} parent=1 // pred_fallthru
      _
    // Predicated region
    $region30: #{tpu_custom_call.1} parent=1 // pred_check
      _
    $region31: #{tpu_custom_call.1} parent=1 // pred_check_branch
      %76 = sbr.rel (0) target = $region33
    $region32: #{tpu_custom_call.1} parent=1 // pred_region
      %78 = dma.done [#allocation9], 128
    $region33: #{tpu_custom_call.1} parent=1 // pred_fallthru
      _
    %v79 = vlaneseq
    %v80 = vand.u32 %v79, 127
    %vm81 = vcmp.lt.s32.totalorder %v80, 32
    %v82 = vld [vmem:[#allocation8] sm:$0x1]
    %v83 = vld [vmem:[#allocation8 + $0x1] sm:$0x1]
    %v84 = vld [vmem:[#allocation8 + $0x2] sm:$0x1]
    %v85 = vld [vmem:[#allocation8 + $0x3] sm:$0x1]
    %v86 = vld [vmem:[#allocation8 + $0x4] sm:$0x1]
    %v87 = vld [vmem:[#allocation8 + $0x5] sm:$0x1]
    %v88 = vld [vmem:[#allocation2] sm:$0xff]
    %v89 = vld [vmem:[#allocation2 + $0x8] sm:$0xff]
    %v90 = vld [vmem:[#allocation2 + $0x10] sm:$0xff]
    %v91 = vld [vmem:[#allocation2 + $0x18] sm:$0xff]
    %v92 = vld [vmem:[#allocation2 + $0x20] sm:$0xff]
    %v93 = vld [vmem:[#allocation2 + $0x28] sm:$0xff]
    %v94 = vld [vmem:[#allocation2 + $0x30] sm:$0xff]
    %v95 = vld [vmem:[#allocation2 + $0x38] sm:$0xff]
    %v96 = vld [vmem:[#allocation2 + $0x40] sm:$0xff]
    %v97 = vld [vmem:[#allocation2 + $0x48] sm:$0xff]
    %v98 = vld [vmem:[#allocation2 + $0x50] sm:$0xff]
    %v99 = vld [vmem:[#allocation2 + $0x58] sm:$0xff]
    %v100 = vld [vmem:[#allocation2 + $0x60] sm:$0xff]
    %v101 = vld [vmem:[#allocation2 + $0x68] sm:$0xff]
    %v102 = vld [vmem:[#allocation2 + $0x70] sm:$0xff]
    %v103 = vld [vmem:[#allocation2 + $0x78] sm:$0xff]
    %v104 = vpack.c.bf16 %v89, %v88
    %v105 = vpack.c.bf16 %v91, %v90
    %v106 = vpack.c.bf16 %v93, %v92
    %v107 = vpack.c.bf16 %v95, %v94
    %v108 = vpack.c.bf16 %v97, %v96
    %v109 = vpack.c.bf16 %v99, %v98
    %v110 = vpack.c.bf16 %v101, %v100
    %v111 = vpack.c.bf16 %v103, %v102
    %v112 = vld [vmem:[#allocation5] sm:$0xf]
    %v113 = vld [vmem:[#allocation5 + $0x4] sm:$0xf]
    %v114 = vld [vmem:[#allocation5 + $0x8] sm:$0xf]
    %v115 = vld [vmem:[#allocation5 + $0xc] sm:$0xf]
    %v116 = vld [vmem:[#allocation5 + $0x10] sm:$0xf]
    %v117 = vld [vmem:[#allocation5 + $0x14] sm:$0xf]
    %v118 = vld [vmem:[#allocation5 + $0x18] sm:$0xf]
    %v119 = vld [vmem:[#allocation5 + $0x1c] sm:$0xf]
    %v120 = vld [vmem:[#allocation5 + $0x20] sm:$0xf]
    %v121 = vld [vmem:[#allocation5 + $0x24] sm:$0xf]
    %v122 = vld [vmem:[#allocation5 + $0x28] sm:$0xf]
    %v123 = vld [vmem:[#allocation5 + $0x2c] sm:$0xf]
    %v124 = vld [vmem:[#allocation5 + $0x30] sm:$0xf]
    %v125 = vld [vmem:[#allocation5 + $0x34] sm:$0xf]
    %v126 = vld [vmem:[#allocation5 + $0x38] sm:$0xf]
    %v127 = vld [vmem:[#allocation5 + $0x3c] sm:$0xf]
    %v128 = vperm.slane %v82, 0
    %v145 = vunpack.c.l.b16 %v112
    %v146 = vunpack.c.l.b16 %v113
    %v147 = vunpack.c.l.b16 %v114
    %v148 = vunpack.c.l.b16 %v115
    %v149 = vunpack.c.l.b16 %v116
    %v150 = vunpack.c.l.b16 %v117
    %v151 = vunpack.c.l.b16 %v118
    %v152 = vunpack.c.l.b16 %v119
    %v153 = vunpack.c.l.b16 %v120
    %v154 = vunpack.c.l.b16 %v121
    %v155 = vunpack.c.l.b16 %v122
    %v156 = vunpack.c.l.b16 %v123
    %v157 = vunpack.c.l.b16 %v124
    %v158 = vunpack.c.l.b16 %v125
    %v159 = vunpack.c.l.b16 %v126
    %v160 = vunpack.c.l.b16 %v127
    %v161 = vpack.c.b16 %v146, %v145
    %v162 = vpack.c.b16 %v148, %v147
    %v163 = vpack.c.b16 %v150, %v149
    %v164 = vpack.c.b16 %v152, %v151
    %v165 = vpack.c.b16 %v154, %v153
    %v166 = vpack.c.b16 %v156, %v155
    %v167 = vpack.c.b16 %v158, %v157
    %v168 = vpack.c.b16 %v160, %v159
    %177 = vmatpush.bf16.msra.mxu0 %v168
    %178 = vmatpush.bf16.msra.mxu0 %v167
    %179 = vmatpush.bf16.msra.mxu0 %v166
    %180 = vmatpush.bf16.msra.mxu0 %v165
    %181 = vmatpush.bf16.msra.mxu0 %v164
    %182 = vmatpush.bf16.msra.mxu0 %v163
    %183 = vmatpush.bf16.msra.mxu0 %v162
    %184 = vmatpush.bf16.msra.mxu0 %v161
    %185 = vmatmul.bf16.gmra.mxu0 %v104
    %v186 = vpop.f32.mrf.mxu0
    %v187 = vadd.f32 %v128, %v186
    %v188 = vpop.f32.mrf.mxu0
    %v189 = vadd.f32 %v128, %v188
    %190 = vmatmul.bf16.gmra.mxu0 %v105
    %v191 = vpop.f32.mrf.mxu0
    %v192 = vadd.f32 %v128, %v191
    %v193 = vpop.f32.mrf.mxu0
    %v194 = vadd.f32 %v128, %v193
    %195 = vmatmul.bf16.gmra.mxu0 %v106
    %v196 = vpop.f32.mrf.mxu0
    %v197 = vadd.f32 %v128, %v196
    %v198 = vpop.f32.mrf.mxu0
    %v199 = vadd.f32 %v128, %v198
    %200 = vmatmul.bf16.gmra.mxu0 %v107
    %v201 = vpop.f32.mrf.mxu0
    %v202 = vadd.f32 %v128, %v201
    %v203 = vpop.f32.mrf.mxu0
    %v204 = vadd.f32 %v128, %v203
    %205 = vmatmul.bf16.gmra.mxu0 %v108
    %v206 = vpop.f32.mrf.mxu0
    %v207 = vadd.f32 %v128, %v206
    %v208 = vpop.f32.mrf.mxu0
    %v209 = vadd.f32 %v128, %v208
    %210 = vmatmul.bf16.gmra.mxu0 %v109
    %v211 = vpop.f32.mrf.mxu0
    %v212 = vadd.f32 %v128, %v211
    %v213 = vpop.f32.mrf.mxu0
    %v214 = vadd.f32 %v128, %v213
    %215 = vmatmul.bf16.gmra.mxu0 %v110
    %v216 = vpop.f32.mrf.mxu0
    %v217 = vadd.f32 %v128, %v216
    %v218 = vpop.f32.mrf.mxu0
    %v219 = vadd.f32 %v128, %v218
    %220 = vmatmul.bf16.gmra.mxu0 %v111
    %v221 = vpop.f32.mrf.mxu0
    %v222 = vadd.f32 %v128, %v221
    %v223 = vpop.f32.mrf.mxu0
    %v224 = vadd.f32 %v128, %v223
    %225 = vdwg.mxu0
    %226 = vadd.xlane.f32.xlu0 %v187
    %v227 = vpop.xlane.xlu0 %226
    %228 = vadd.xlane.f32.xlu0 %v189
    %v229 = vpop.xlane.xlu0 %228
    %230 = vadd.xlane.f32.xlu0 %v192
    %v231 = vpop.xlane.xlu0 %230
    %232 = vadd.xlane.f32.xlu0 %v194
    %v233 = vpop.xlane.xlu0 %232
    %234 = vadd.xlane.f32.xlu0 %v197
    %v235 = vpop.xlane.xlu0 %234
    %236 = vadd.xlane.f32.xlu0 %v199
    %v237 = vpop.xlane.xlu0 %236
    %238 = vadd.xlane.f32.xlu0 %v202
    %v239 = vpop.xlane.xlu0 %238
    %240 = vadd.xlane.f32.xlu0 %v204
    %v241 = vpop.xlane.xlu0 %240
    %242 = vadd.xlane.f32.xlu0 %v207
    %v243 = vpop.xlane.xlu0 %242
    %244 = vadd.xlane.f32.xlu0 %v209
    %v245 = vpop.xlane.xlu0 %244
    %246 = vadd.xlane.f32.xlu0 %v212
    %v247 = vpop.xlane.xlu0 %246
    %248 = vadd.xlane.f32.xlu0 %v214
    %v249 = vpop.xlane.xlu0 %248
    %250 = vadd.xlane.f32.xlu0 %v217
    %v251 = vpop.xlane.xlu0 %250
    %252 = vadd.xlane.f32.xlu0 %v219
    %v253 = vpop.xlane.xlu0 %252
    %254 = vadd.xlane.f32.xlu0 %v222
    %v255 = vpop.xlane.xlu0 %254
    %256 = vadd.xlane.f32.xlu0 %v224
    %v257 = vpop.xlane.xlu0 %256
    %v258 = vmul.f32 %v227, 0.03125
    %v259 = vmul.f32 %v229, 0.03125
    %v260 = vmul.f32 %v231, 0.03125
    %v261 = vmul.f32 %v233, 0.03125
    %v262 = vmul.f32 %v235, 0.03125
    %v263 = vmul.f32 %v237, 0.03125
    %v264 = vmul.f32 %v239, 0.03125
    %v265 = vmul.f32 %v241, 0.03125
    %v266 = vmul.f32 %v243, 0.03125
    %v267 = vmul.f32 %v245, 0.03125
    %v268 = vmul.f32 %v247, 0.03125
    %v269 = vmul.f32 %v249, 0.03125
    %v270 = vmul.f32 %v251, 0.03125
    %v271 = vmul.f32 %v253, 0.03125
    %v272 = vmul.f32 %v255, 0.03125
    %v273 = vmul.f32 %v257, 0.03125
    %v274 = vsub.f32 %v187, %v258
    %v275 = vsub.f32 %v189, %v259
    %v276 = vsub.f32 %v192, %v260
    %v277 = vsub.f32 %v194, %v261
    %v278 = vsub.f32 %v197, %v262
    %v279 = vsub.f32 %v199, %v263
    %v280 = vsub.f32 %v202, %v264
    %v281 = vsub.f32 %v204, %v265
    %v282 = vsub.f32 %v207, %v266
    %v283 = vsub.f32 %v209, %v267
    %v284 = vsub.f32 %v212, %v268
    %v285 = vsub.f32 %v214, %v269
    %v286 = vsub.f32 %v217, %v270
    %v287 = vsub.f32 %v219, %v271
    %v288 = vsub.f32 %v222, %v272
    %v289 = vsub.f32 %v224, %v273
    %v290 = vsel %vm81, 1, 0
    %vm291 = vcmp.eq.s32.totalorder %v290, 1
    %v292 = vsel %vm291, %v274, 0.0
    %v293 = vsel %vm291, %v275, 0.0
    %v294 = vsel %vm291, %v276, 0.0
    %v295 = vsel %vm291, %v277, 0.0
    %v296 = vsel %vm291, %v278, 0.0
    %v297 = vsel %vm291, %v279, 0.0
    %v298 = vsel %vm291, %v280, 0.0
    %v299 = vsel %vm291, %v281, 0.0
    %v300 = vsel %vm291, %v282, 0.0
    %v301 = vsel %vm291, %v283, 0.0
    %v302 = vsel %vm291, %v284, 0.0
    %v303 = vsel %vm291, %v285, 0.0
    %v304 = vsel %vm291, %v286, 0.0
    %v305 = vsel %vm291, %v287, 0.0
    %v306 = vsel %vm291, %v288, 0.0
    %v307 = vsel %vm291, %v289, 0.0
    %v308 = vmul.f32 %v292, %v292
    %v309 = vmul.f32 %v293, %v293
    %v310 = vmul.f32 %v294, %v294
    %v311 = vmul.f32 %v295, %v295
    %v312 = vmul.f32 %v296, %v296
    %v313 = vmul.f32 %v297, %v297
    %v314 = vmul.f32 %v298, %v298
    %v315 = vmul.f32 %v299, %v299
    %v316 = vmul.f32 %v300, %v300
    %v317 = vmul.f32 %v301, %v301
    %v318 = vmul.f32 %v302, %v302
    %v319 = vmul.f32 %v303, %v303
    %v320 = vmul.f32 %v304, %v304
    %v321 = vmul.f32 %v305, %v305
    %v322 = vmul.f32 %v306, %v306
    %v323 = vmul.f32 %v307, %v307
    %324 = vadd.xlane.f32.xlu0 %v308
    %v325 = vpop.xlane.xlu0 %324
    %326 = vadd.xlane.f32.xlu0 %v309
    %v327 = vpop.xlane.xlu0 %326
    %328 = vadd.xlane.f32.xlu0 %v310
    %v329 = vpop.xlane.xlu0 %328
    %330 = vadd.xlane.f32.xlu0 %v311
    %v331 = vpop.xlane.xlu0 %330
    %332 = vadd.xlane.f32.xlu0 %v312
    %v333 = vpop.xlane.xlu0 %332
    %334 = vadd.xlane.f32.xlu0 %v313
    %v335 = vpop.xlane.xlu0 %334
    %336 = vadd.xlane.f32.xlu0 %v314
    %v337 = vpop.xlane.xlu0 %336
    %338 = vadd.xlane.f32.xlu0 %v315
    %v339 = vpop.xlane.xlu0 %338
    %340 = vadd.xlane.f32.xlu0 %v316
    %v341 = vpop.xlane.xlu0 %340
    %342 = vadd.xlane.f32.xlu0 %v317
    %v343 = vpop.xlane.xlu0 %342
    %344 = vadd.xlane.f32.xlu0 %v318
    %v345 = vpop.xlane.xlu0 %344
    %346 = vadd.xlane.f32.xlu0 %v319
    %v347 = vpop.xlane.xlu0 %346
    %348 = vadd.xlane.f32.xlu0 %v320
    %v349 = vpop.xlane.xlu0 %348
    %350 = vadd.xlane.f32.xlu0 %v321
    %v351 = vpop.xlane.xlu0 %350
    %352 = vadd.xlane.f32.xlu0 %v322
    %v353 = vpop.xlane.xlu0 %352
    %354 = vadd.xlane.f32.xlu0 %v323
    %v355 = vpop.xlane.xlu0 %354
    %v356 = vmul.f32 %v325, 0.03125
    %v357 = vmul.f32 %v327, 0.03125
    %v358 = vmul.f32 %v329, 0.03125
    %v359 = vmul.f32 %v331, 0.03125
    %v360 = vmul.f32 %v333, 0.03125
    %v361 = vmul.f32 %v335, 0.03125
    %v362 = vmul.f32 %v337, 0.03125
    %v363 = vmul.f32 %v339, 0.03125
    %v364 = vmul.f32 %v341, 0.03125
    %v365 = vmul.f32 %v343, 0.03125
    %v366 = vmul.f32 %v345, 0.03125
    %v367 = vmul.f32 %v347, 0.03125
    %v368 = vmul.f32 %v349, 0.03125
    %v369 = vmul.f32 %v351, 0.03125
    %v370 = vmul.f32 %v353, 0.03125
    %v371 = vmul.f32 %v355, 0.03125
    %v372 = vadd.f32 %v356, 1e-05
    %v373 = vadd.f32 %v357, 1e-05
    %v374 = vadd.f32 %v358, 1e-05
    %v375 = vadd.f32 %v359, 1e-05
    %v376 = vadd.f32 %v360, 1e-05
    %v377 = vadd.f32 %v361, 1e-05
    %v378 = vadd.f32 %v362, 1e-05
    %v379 = vadd.f32 %v363, 1e-05
    %v380 = vadd.f32 %v364, 1e-05
    %v381 = vadd.f32 %v365, 1e-05
    %v382 = vadd.f32 %v366, 1e-05
    %v383 = vadd.f32 %v367, 1e-05
    %v384 = vadd.f32 %v368, 1e-05
    %v385 = vadd.f32 %v369, 1e-05
    %v386 = vadd.f32 %v370, 1e-05
    %v387 = vadd.f32 %v371, 1e-05
    %v388 = vrsqrt.pop %v372
    %v389 = vmul.f32 %v388, %v372
    %v390 = vmul.f32 %v389, %v388
    %v391 = vmul.f32 0.5, %v390
    %v392 = vsub.f32 1.5, %v391
    %v393 = vmul.f32 %v388, %v392
    %vm394 = vweird.f32 %v372
    %vm395 = vweird.f32 %v388
    %vm396 = vmor %vm394, %vm395
    %v397 = vsel %vm396, %v388, %v393
    %v398 = vrsqrt.pop %v373
    %v399 = vmul.f32 %v398, %v373
    %v400 = vmul.f32 %v399, %v398
    %v401 = vmul.f32 0.5, %v400
    %v402 = vsub.f32 1.5, %v401
    %v403 = vmul.f32 %v398, %v402
    %vm404 = vweird.f32 %v373
    %vm405 = vweird.f32 %v398
    %vm406 = vmor %vm404, %vm405
    %v407 = vsel %vm406, %v398, %v403
    %v408 = vrsqrt.pop %v374
    %v409 = vmul.f32 %v408, %v374
    %v410 = vmul.f32 %v409, %v408
    %v411 = vmul.f32 0.5, %v410
    %v412 = vsub.f32 1.5, %v411
    %v413 = vmul.f32 %v408, %v412
    %vm414 = vweird.f32 %v374
    %vm415 = vweird.f32 %v408
    %vm416 = vmor %vm414, %vm415
    %v417 = vsel %vm416, %v408, %v413
    %v418 = vrsqrt.pop %v375
    %v419 = vmul.f32 %v418, %v375
    %v420 = vmul.f32 %v419, %v418
    %v421 = vmul.f32 0.5, %v420
    %v422 = vsub.f32 1.5, %v421
    %v423 = vmul.f32 %v418, %v422
    %vm424 = vweird.f32 %v375
    %vm425 = vweird.f32 %v418
    %vm426 = vmor %vm424, %vm425
    %v427 = vsel %vm426, %v418, %v423
    %v428 = vrsqrt.pop %v376
    %v429 = vmul.f32 %v428, %v376
    %v430 = vmul.f32 %v429, %v428
    %v431 = vmul.f32 0.5, %v430
    %v432 = vsub.f32 1.5, %v431
    %v433 = vmul.f32 %v428, %v432
    %vm434 = vweird.f32 %v376
    %vm435 = vweird.f32 %v428
    %vm436 = vmor %vm434, %vm435
    %v437 = vsel %vm436, %v428, %v433
    %v438 = vrsqrt.pop %v377
    %v439 = vmul.f32 %v438, %v377
    %v440 = vmul.f32 %v439, %v438
    %v441 = vmul.f32 0.5, %v440
    %v442 = vsub.f32 1.5, %v441
    %v443 = vmul.f32 %v438, %v442
    %vm444 = vweird.f32 %v377
    %vm445 = vweird.f32 %v438
    %vm446 = vmor %vm444, %vm445
    %v447 = vsel %vm446, %v438, %v443
    %v448 = vrsqrt.pop %v378
    %v449 = vmul.f32 %v448, %v378
    %v450 = vmul.f32 %v449, %v448
    %v451 = vmul.f32 0.5, %v450
    %v452 = vsub.f32 1.5, %v451
    %v453 = vmul.f32 %v448, %v452
    %vm454 = vweird.f32 %v378
    %vm455 = vweird.f32 %v448
    %vm456 = vmor %vm454, %vm455
    %v457 = vsel %vm456, %v448, %v453
    %v458 = vrsqrt.pop %v379
    %v459 = vmul.f32 %v458, %v379
    %v460 = vmul.f32 %v459, %v458
    %v461 = vmul.f32 0.5, %v460
    %v462 = vsub.f32 1.5, %v461
    %v463 = vmul.f32 %v458, %v462
    %vm464 = vweird.f32 %v379
    %vm465 = vweird.f32 %v458
    %vm466 = vmor %vm464, %vm465
    %v467 = vsel %vm466, %v458, %v463
    %v468 = vrsqrt.pop %v380
    %v469 = vmul.f32 %v468, %v380
    %v470 = vmul.f32 %v469, %v468
    %v471 = vmul.f32 0.5, %v470
    %v472 = vsub.f32 1.5, %v471
    %v473 = vmul.f32 %v468, %v472
    %vm474 = vweird.f32 %v380
    %vm475 = vweird.f32 %v468
    %vm476 = vmor %vm474, %vm475
    %v477 = vsel %vm476, %v468, %v473
    %v478 = vrsqrt.pop %v381
    %v479 = vmul.f32 %v478, %v381
    %v480 = vmul.f32 %v479, %v478
    %v481 = vmul.f32 0.5, %v480
    %v482 = vsub.f32 1.5, %v481
    %v483 = vmul.f32 %v478, %v482
    %vm484 = vweird.f32 %v381
    %vm485 = vweird.f32 %v478
    %vm486 = vmor %vm484, %vm485
    %v487 = vsel %vm486, %v478, %v483
    %v488 = vrsqrt.pop %v382
    %v489 = vmul.f32 %v488, %v382
    %v490 = vmul.f32 %v489, %v488
    %v491 = vmul.f32 0.5, %v490
    %v492 = vsub.f32 1.5, %v491
    %v493 = vmul.f32 %v488, %v492
    %vm494 = vweird.f32 %v382
    %vm495 = vweird.f32 %v488
    %vm496 = vmor %vm494, %vm495
    %v497 = vsel %vm496, %v488, %v493
    %v498 = vrsqrt.pop %v383
    %v499 = vmul.f32 %v498, %v383
    %v500 = vmul.f32 %v499, %v498
    %v501 = vmul.f32 0.5, %v500
    %v502 = vsub.f32 1.5, %v501
    %v503 = vmul.f32 %v498, %v502
    %vm504 = vweird.f32 %v383
    %vm505 = vweird.f32 %v498
    %vm506 = vmor %vm504, %vm505
    %v507 = vsel %vm506, %v498, %v503
    %v508 = vrsqrt.pop %v384
    %v509 = vmul.f32 %v508, %v384
    %v510 = vmul.f32 %v509, %v508
    %v511 = vmul.f32 0.5, %v510
    %v512 = vsub.f32 1.5, %v511
    %v513 = vmul.f32 %v508, %v512
    %vm514 = vweird.f32 %v384
    %vm515 = vweird.f32 %v508
    %vm516 = vmor %vm514, %vm515
    %v517 = vsel %vm516, %v508, %v513
    %v518 = vrsqrt.pop %v385
    %v519 = vmul.f32 %v518, %v385
    %v520 = vmul.f32 %v519, %v518
    %v521 = vmul.f32 0.5, %v520
    %v522 = vsub.f32 1.5, %v521
    %v523 = vmul.f32 %v518, %v522
    %vm524 = vweird.f32 %v385
    %vm525 = vweird.f32 %v518
    %vm526 = vmor %vm524, %vm525
    %v527 = vsel %vm526, %v518, %v523
    %v528 = vrsqrt.pop %v386
    %v529 = vmul.f32 %v528, %v386
    %v530 = vmul.f32 %v529, %v528
    %v531 = vmul.f32 0.5, %v530
    %v532 = vsub.f32 1.5, %v531
    %v533 = vmul.f32 %v528, %v532
    %vm534 = vweird.f32 %v386
    %vm535 = vweird.f32 %v528
    %vm536 = vmor %vm534, %vm535
    %v537 = vsel %vm536, %v528, %v533
    %v538 = vrsqrt.pop %v387
    %v539 = vmul.f32 %v538, %v387
    %v540 = vmul.f32 %v539, %v538
    %v541 = vmul.f32 0.5, %v540
    %v542 = vsub.f32 1.5, %v541
    %v543 = vmul.f32 %v538, %v542
    %vm544 = vweird.f32 %v387
    %vm545 = vweird.f32 %v538
    %vm546 = vmor %vm544, %vm545
    %v547 = vsel %vm546, %v538, %v543
    %v548 = vmul.f32 %v292, %v397
    %v549 = vmul.f32 %v293, %v407
    %v550 = vmul.f32 %v294, %v417
    %v551 = vmul.f32 %v295, %v427
    %v552 = vmul.f32 %v296, %v437
    %v553 = vmul.f32 %v297, %v447
    %v554 = vmul.f32 %v298, %v457
    %v555 = vmul.f32 %v299, %v467
    %v556 = vmul.f32 %v300, %v477
    %v557 = vmul.f32 %v301, %v487
    %v558 = vmul.f32 %v302, %v497
    %v559 = vmul.f32 %v303, %v507
    %v560 = vmul.f32 %v304, %v517
    %v561 = vmul.f32 %v305, %v527
    %v562 = vmul.f32 %v306, %v537
    %v563 = vmul.f32 %v307, %v547
    %v564 = vperm.slane %v83, 0
    %v565 = vmul.f32 %v548, %v564
    %v566 = vmul.f32 %v549, %v564
    %v567 = vmul.f32 %v550, %v564
    %v568 = vmul.f32 %v551, %v564
    %v569 = vmul.f32 %v552, %v564
    %v570 = vmul.f32 %v553, %v564
    %v571 = vmul.f32 %v554, %v564
    %v572 = vmul.f32 %v555, %v564
    %v573 = vmul.f32 %v556, %v564
    %v574 = vmul.f32 %v557, %v564
    %v575 = vmul.f32 %v558, %v564
    %v576 = vmul.f32 %v559, %v564
    %v577 = vmul.f32 %v560, %v564
    %v578 = vmul.f32 %v561, %v564
    %v579 = vmul.f32 %v562, %v564
    %v580 = vmul.f32 %v563, %v564
    %v581 = vperm.slane %v84, 0
    %v582 = vadd.f32 %v565, %v581
    %v583 = vadd.f32 %v566, %v581
    %v584 = vadd.f32 %v567, %v581
    %v585 = vadd.f32 %v568, %v581
    %v586 = vadd.f32 %v569, %v581
    %v587 = vadd.f32 %v570, %v581
    %v588 = vadd.f32 %v571, %v581
    %v589 = vadd.f32 %v572, %v581
    %v590 = vadd.f32 %v573, %v581
    %v591 = vadd.f32 %v574, %v581
    %v592 = vadd.f32 %v575, %v581
    %v593 = vadd.f32 %v576, %v581
    %v594 = vadd.f32 %v577, %v581
    %v595 = vadd.f32 %v578, %v581
    %v596 = vadd.f32 %v579, %v581
    %v597 = vadd.f32 %v580, %v581
    %v598 = vmul.f32 %v582, 0.5
    %v599 = vmul.f32 %v583, 0.5
    %v600 = vmul.f32 %v584, 0.5
    %v601 = vmul.f32 %v585, 0.5
    %v602 = vmul.f32 %v586, 0.5
    %v603 = vmul.f32 %v587, 0.5
    %v604 = vmul.f32 %v588, 0.5
    %v605 = vmul.f32 %v589, 0.5
    %v606 = vmul.f32 %v590, 0.5
    %v607 = vmul.f32 %v591, 0.5
    %v608 = vmul.f32 %v592, 0.5
    %v609 = vmul.f32 %v593, 0.5
    %v610 = vmul.f32 %v594, 0.5
    %v611 = vmul.f32 %v595, 0.5
    %v612 = vmul.f32 %v596, 0.5
    %v613 = vmul.f32 %v597, 0.5
    %v614 = vmul.f32 %v582, 0.044715
    %v615 = vmul.f32 %v583, 0.044715
    %v616 = vmul.f32 %v584, 0.044715
    %v617 = vmul.f32 %v585, 0.044715
    %v618 = vmul.f32 %v586, 0.044715
    %v619 = vmul.f32 %v587, 0.044715
    %v620 = vmul.f32 %v588, 0.044715
    %v621 = vmul.f32 %v589, 0.044715
    %v622 = vmul.f32 %v590, 0.044715
    %v623 = vmul.f32 %v591, 0.044715
    %v624 = vmul.f32 %v592, 0.044715
    %v625 = vmul.f32 %v593, 0.044715
    %v626 = vmul.f32 %v594, 0.044715
    %v627 = vmul.f32 %v595, 0.044715
    %v628 = vmul.f32 %v596, 0.044715
    %v629 = vmul.f32 %v597, 0.044715
    %v630 = vmul.f32 %v614, %v582
    %v631 = vmul.f32 %v615, %v583
    %v632 = vmul.f32 %v616, %v584
    %v633 = vmul.f32 %v617, %v585
    %v634 = vmul.f32 %v618, %v586
    %v635 = vmul.f32 %v619, %v587
    %v636 = vmul.f32 %v620, %v588
    %v637 = vmul.f32 %v621, %v589
    %v638 = vmul.f32 %v622, %v590
    %v639 = vmul.f32 %v623, %v591
    %v640 = vmul.f32 %v624, %v592
    %v641 = vmul.f32 %v625, %v593
    %v642 = vmul.f32 %v626, %v594
    %v643 = vmul.f32 %v627, %v595
    %v644 = vmul.f32 %v628, %v596
    %v645 = vmul.f32 %v629, %v597
    %v646 = vmul.f32 %v630, %v582
    %v647 = vmul.f32 %v631, %v583
    %v648 = vmul.f32 %v632, %v584
    %v649 = vmul.f32 %v633, %v585
    %v650 = vmul.f32 %v634, %v586
    %v651 = vmul.f32 %v635, %v587
    %v652 = vmul.f32 %v636, %v588
    %v653 = vmul.f32 %v637, %v589
    %v654 = vmul.f32 %v638, %v590
    %v655 = vmul.f32 %v639, %v591
    %v656 = vmul.f32 %v640, %v592
    %v657 = vmul.f32 %v641, %v593
    %v658 = vmul.f32 %v642, %v594
    %v659 = vmul.f32 %v643, %v595
    %v660 = vmul.f32 %v644, %v596
    %v661 = vmul.f32 %v645, %v597
    %v662 = vadd.f32 %v582, %v646
    %v663 = vadd.f32 %v583, %v647
    %v664 = vadd.f32 %v584, %v648
    %v665 = vadd.f32 %v585, %v649
    %v666 = vadd.f32 %v586, %v650
    %v667 = vadd.f32 %v587, %v651
    %v668 = vadd.f32 %v588, %v652
    %v669 = vadd.f32 %v589, %v653
    %v670 = vadd.f32 %v590, %v654
    %v671 = vadd.f32 %v591, %v655
    %v672 = vadd.f32 %v592, %v656
    %v673 = vadd.f32 %v593, %v657
    %v674 = vadd.f32 %v594, %v658
    %v675 = vadd.f32 %v595, %v659
    %v676 = vadd.f32 %v596, %v660
    %v677 = vadd.f32 %v597, %v661
    %v678 = vmul.f32 %v662, 0.7978846
    %v679 = vmul.f32 %v663, 0.7978846
    %v680 = vmul.f32 %v664, 0.7978846
    %v681 = vmul.f32 %v665, 0.7978846
    %v682 = vmul.f32 %v666, 0.7978846
    %v683 = vmul.f32 %v667, 0.7978846
    %v684 = vmul.f32 %v668, 0.7978846
    %v685 = vmul.f32 %v669, 0.7978846
    %v686 = vmul.f32 %v670, 0.7978846
    %v687 = vmul.f32 %v671, 0.7978846
    %v688 = vmul.f32 %v672, 0.7978846
    %v689 = vmul.f32 %v673, 0.7978846
    %v690 = vmul.f32 %v674, 0.7978846
    %v691 = vmul.f32 %v675, 0.7978846
    %v692 = vmul.f32 %v676, 0.7978846
    %v693 = vmul.f32 %v677, 0.7978846
    %v694 = vtanh.pop %v678
    %v695 = vtanh.pop %v679
    %v696 = vtanh.pop %v680
    %v697 = vtanh.pop %v681
    %v698 = vtanh.pop %v682
    %v699 = vtanh.pop %v683
    %v700 = vtanh.pop %v684
    %v701 = vtanh.pop %v685
    %v702 = vtanh.pop %v686
    %v703 = vtanh.pop %v687
    %v704 = vtanh.pop %v688
    %v705 = vtanh.pop %v689
    %v706 = vtanh.pop %v690
    %v707 = vtanh.pop %v691
    %v708 = vtanh.pop %v692
    %v709 = vtanh.pop %v693
    %v710 = vadd.f32 %v694, 1.0
    %v711 = vadd.f32 %v695, 1.0
    %v712 = vadd.f32 %v696, 1.0
    %v713 = vadd.f32 %v697, 1.0
    %v714 = vadd.f32 %v698, 1.0
    %v715 = vadd.f32 %v699, 1.0
    %v716 = vadd.f32 %v700, 1.0
    %v717 = vadd.f32 %v701, 1.0
    %v718 = vadd.f32 %v702, 1.0
    %v719 = vadd.f32 %v703, 1.0
    %v720 = vadd.f32 %v704, 1.0
    %v721 = vadd.f32 %v705, 1.0
    %v722 = vadd.f32 %v706, 1.0
    %v723 = vadd.f32 %v707, 1.0
    %v724 = vadd.f32 %v708, 1.0
    %v725 = vadd.f32 %v709, 1.0
    %v726 = vmul.f32 %v598, %v710
    %v727 = vmul.f32 %v599, %v711
    %v728 = vmul.f32 %v600, %v712
    %v729 = vmul.f32 %v601, %v713
    %v730 = vmul.f32 %v602, %v714
    %v731 = vmul.f32 %v603, %v715
    %v732 = vmul.f32 %v604, %v716
    %v733 = vmul.f32 %v605, %v717
    %v734 = vmul.f32 %v606, %v718
    %v735 = vmul.f32 %v607, %v719
    %v736 = vmul.f32 %v608, %v720
    %v737 = vmul.f32 %v609, %v721
    %v738 = vmul.f32 %v610, %v722
    %v739 = vmul.f32 %v611, %v723
    %v740 = vmul.f32 %v612, %v724
    %v741 = vmul.f32 %v613, %v725
    %v742 = vpack.c.bf16 %v727, %v726
    %v743 = vpack.c.bf16 %v729, %v728
    %v744 = vpack.c.bf16 %v731, %v730
    %v745 = vpack.c.bf16 %v733, %v732
    %v746 = vpack.c.bf16 %v735, %v734
    %v747 = vpack.c.bf16 %v737, %v736
    %v748 = vpack.c.bf16 %v739, %v738
    %v749 = vpack.c.bf16 %v741, %v740
    %v750 = vld [vmem:[#allocation7] sm:$0xf]
    %v751 = vld [vmem:[#allocation7 + $0x4] sm:$0xf]
    %v752 = vld [vmem:[#allocation7 + $0x8] sm:$0xf]
    %v753 = vld [vmem:[#allocation7 + $0xc] sm:$0xf]
    %v754 = vld [vmem:[#allocation7 + $0x10] sm:$0xf]
    %v755 = vld [vmem:[#allocation7 + $0x14] sm:$0xf]
    %v756 = vld [vmem:[#allocation7 + $0x18] sm:$0xf]
    %v757 = vld [vmem:[#allocation7 + $0x1c] sm:$0xf]
    %v758 = vld [vmem:[#allocation7 + $0x20] sm:$0xf]
    %v759 = vld [vmem:[#allocation7 + $0x24] sm:$0xf]
    %v760 = vld [vmem:[#allocation7 + $0x28] sm:$0xf]
    %v761 = vld [vmem:[#allocation7 + $0x2c] sm:$0xf]
    %v762 = vld [vmem:[#allocation7 + $0x30] sm:$0xf]
    %v763 = vld [vmem:[#allocation7 + $0x34] sm:$0xf]
    %v764 = vld [vmem:[#allocation7 + $0x38] sm:$0xf]
    %v765 = vld [vmem:[#allocation7 + $0x3c] sm:$0xf]
    %v766 = vperm.slane %v85, 0
    %v783 = vunpack.c.l.b16 %v750
    %v784 = vunpack.c.l.b16 %v751
    %v785 = vunpack.c.l.b16 %v752
    %v786 = vunpack.c.l.b16 %v753
    %v787 = vunpack.c.l.b16 %v754
    %v788 = vunpack.c.l.b16 %v755
    %v789 = vunpack.c.l.b16 %v756
    %v790 = vunpack.c.l.b16 %v757
    %v791 = vunpack.c.l.b16 %v758
    %v792 = vunpack.c.l.b16 %v759
    %v793 = vunpack.c.l.b16 %v760
    %v794 = vunpack.c.l.b16 %v761
    %v795 = vunpack.c.l.b16 %v762
    %v796 = vunpack.c.l.b16 %v763
    %v797 = vunpack.c.l.b16 %v764
    %v798 = vunpack.c.l.b16 %v765
    %v799 = vpack.c.b16 %v784, %v783
    %v800 = vpack.c.b16 %v786, %v785
    %v801 = vpack.c.b16 %v788, %v787
    %v802 = vpack.c.b16 %v790, %v789
    %v803 = vpack.c.b16 %v792, %v791
    %v804 = vpack.c.b16 %v794, %v793
    %v805 = vpack.c.b16 %v796, %v795
    %v806 = vpack.c.b16 %v798, %v797
    %815 = vmatpush.bf16.msra.mxu0 %v806
    %816 = vmatpush.bf16.msra.mxu0 %v805
    %817 = vmatpush.bf16.msra.mxu0 %v804
    %818 = vmatpush.bf16.msra.mxu0 %v803
    %819 = vmatpush.bf16.msra.mxu0 %v802
    %820 = vmatpush.bf16.msra.mxu0 %v801
    %821 = vmatpush.bf16.msra.mxu0 %v800
    %822 = vmatpush.bf16.msra.mxu0 %v799
    %823 = vmatmul.bf16.gmra.mxu0 %v742
    %v824 = vpop.f32.mrf.mxu0
    %v825 = vadd.f32 %v766, %v824
    %v826 = vpop.f32.mrf.mxu0
    %v827 = vadd.f32 %v766, %v826
    %828 = vmatmul.bf16.gmra.mxu0 %v743
    %v829 = vpop.f32.mrf.mxu0
    %v830 = vadd.f32 %v766, %v829
    %v831 = vpop.f32.mrf.mxu0
    %v832 = vadd.f32 %v766, %v831
    %833 = vmatmul.bf16.gmra.mxu0 %v744
    %v834 = vpop.f32.mrf.mxu0
    %v835 = vadd.f32 %v766, %v834
    %v836 = vpop.f32.mrf.mxu0
    %v837 = vadd.f32 %v766, %v836
    %838 = vmatmul.bf16.gmra.mxu0 %v745
    %v839 = vpop.f32.mrf.mxu0
    %v840 = vadd.f32 %v766, %v839
    %v841 = vpop.f32.mrf.mxu0
    %v842 = vadd.f32 %v766, %v841
    %843 = vmatmul.bf16.gmra.mxu0 %v746
    %v844 = vpop.f32.mrf.mxu0
    %v845 = vadd.f32 %v766, %v844
    %v846 = vpop.f32.mrf.mxu0
    %v847 = vadd.f32 %v766, %v846
    %848 = vmatmul.bf16.gmra.mxu0 %v747
    %v849 = vpop.f32.mrf.mxu0
    %v850 = vadd.f32 %v766, %v849
    %v851 = vpop.f32.mrf.mxu0
    %v852 = vadd.f32 %v766, %v851
    %853 = vmatmul.bf16.gmra.mxu0 %v748
    %v854 = vpop.f32.mrf.mxu0
    %v855 = vadd.f32 %v766, %v854
    %v856 = vpop.f32.mrf.mxu0
    %v857 = vadd.f32 %v766, %v856
    %858 = vmatmul.bf16.gmra.mxu0 %v749
    %v859 = vpop.f32.mrf.mxu0
    %v860 = vadd.f32 %v766, %v859
    %v861 = vpop.f32.mrf.mxu0
    %v862 = vadd.f32 %v766, %v861
    %863 = vdwg.mxu0
    %864 = vadd.xlane.f32.xlu0 %v825
    %v865 = vpop.xlane.xlu0 %864
    %866 = vadd.xlane.f32.xlu0 %v827
    %v867 = vpop.xlane.xlu0 %866
    %868 = vadd.xlane.f32.xlu0 %v830
    %v869 = vpop.xlane.xlu0 %868
    %870 = vadd.xlane.f32.xlu0 %v832
    %v871 = vpop.xlane.xlu0 %870
    %872 = vadd.xlane.f32.xlu0 %v835
    %v873 = vpop.xlane.xlu0 %872
    %874 = vadd.xlane.f32.xlu0 %v837
    %v875 = vpop.xlane.xlu0 %874
    %876 = vadd.xlane.f32.xlu0 %v840
    %v877 = vpop.xlane.xlu0 %876
    %878 = vadd.xlane.f32.xlu0 %v842
    %v879 = vpop.xlane.xlu0 %878
    %880 = vadd.xlane.f32.xlu0 %v845
    %v881 = vpop.xlane.xlu0 %880
    %882 = vadd.xlane.f32.xlu0 %v847
    %v883 = vpop.xlane.xlu0 %882
    %884 = vadd.xlane.f32.xlu0 %v850
    %v885 = vpop.xlane.xlu0 %884
    %886 = vadd.xlane.f32.xlu0 %v852
    %v887 = vpop.xlane.xlu0 %886
    %888 = vadd.xlane.f32.xlu0 %v855
    %v889 = vpop.xlane.xlu0 %888
    %890 = vadd.xlane.f32.xlu0 %v857
    %v891 = vpop.xlane.xlu0 %890
    %892 = vadd.xlane.f32.xlu0 %v860
    %v893 = vpop.xlane.xlu0 %892
    %894 = vadd.xlane.f32.xlu0 %v862
    %v895 = vpop.xlane.xlu0 %894
    %v896 = vmul.f32 %v865, 0.03125
    %v897 = vmul.f32 %v867, 0.03125
    %v898 = vmul.f32 %v869, 0.03125
    %v899 = vmul.f32 %v871, 0.03125
    %v900 = vmul.f32 %v873, 0.03125
    %v901 = vmul.f32 %v875, 0.03125
    %v902 = vmul.f32 %v877, 0.03125
    %v903 = vmul.f32 %v879, 0.03125
    %v904 = vmul.f32 %v881, 0.03125
    %v905 = vmul.f32 %v883, 0.03125
    %v906 = vmul.f32 %v885, 0.03125
    %v907 = vmul.f32 %v887, 0.03125
    %v908 = vmul.f32 %v889, 0.03125
    %v909 = vmul.f32 %v891, 0.03125
    %v910 = vmul.f32 %v893, 0.03125
    %v911 = vmul.f32 %v895, 0.03125
    %v912 = vsub.f32 %v825, %v896
    %v913 = vsub.f32 %v827, %v897
    %v914 = vsub.f32 %v830, %v898
    %v915 = vsub.f32 %v832, %v899
    %v916 = vsub.f32 %v835, %v900
    %v917 = vsub.f32 %v837, %v901
    %v918 = vsub.f32 %v840, %v902
    %v919 = vsub.f32 %v842, %v903
    %v920 = vsub.f32 %v845, %v904
    %v921 = vsub.f32 %v847, %v905
    %v922 = vsub.f32 %v850, %v906
    %v923 = vsub.f32 %v852, %v907
    %v924 = vsub.f32 %v855, %v908
    %v925 = vsub.f32 %v857, %v909
    %v926 = vsub.f32 %v860, %v910
    %v927 = vsub.f32 %v862, %v911
    %v928 = vsel %vm291, %v912, 0.0
    %v929 = vsel %vm291, %v913, 0.0
    %v930 = vsel %vm291, %v914, 0.0
    %v931 = vsel %vm291, %v915, 0.0
    %v932 = vsel %vm291, %v916, 0.0
    %v933 = vsel %vm291, %v917, 0.0
    %v934 = vsel %vm291, %v918, 0.0
    %v935 = vsel %vm291, %v919, 0.0
    %v936 = vsel %vm291, %v920, 0.0
    %v937 = vsel %vm291, %v921, 0.0
    %v938 = vsel %vm291, %v922, 0.0
    %v939 = vsel %vm291, %v923, 0.0
    %v940 = vsel %vm291, %v924, 0.0
    %v941 = vsel %vm291, %v925, 0.0
    %v942 = vsel %vm291, %v926, 0.0
    %v943 = vsel %vm291, %v927, 0.0
    %v944 = vmul.f32 %v928, %v928
    %v945 = vmul.f32 %v929, %v929
    %v946 = vmul.f32 %v930, %v930
    %v947 = vmul.f32 %v931, %v931
    %v948 = vmul.f32 %v932, %v932
    %v949 = vmul.f32 %v933, %v933
    %v950 = vmul.f32 %v934, %v934
    %v951 = vmul.f32 %v935, %v935
    %v952 = vmul.f32 %v936, %v936
    %v953 = vmul.f32 %v937, %v937
    %v954 = vmul.f32 %v938, %v938
    %v955 = vmul.f32 %v939, %v939
    %v956 = vmul.f32 %v940, %v940
    %v957 = vmul.f32 %v941, %v941
    %v958 = vmul.f32 %v942, %v942
    %v959 = vmul.f32 %v943, %v943
    %960 = vadd.xlane.f32.xlu0 %v944
    %v961 = vpop.xlane.xlu0 %960
    %962 = vadd.xlane.f32.xlu0 %v945
    %v963 = vpop.xlane.xlu0 %962
    %964 = vadd.xlane.f32.xlu0 %v946
    %v965 = vpop.xlane.xlu0 %964
    %966 = vadd.xlane.f32.xlu0 %v947
    %v967 = vpop.xlane.xlu0 %966
    %968 = vadd.xlane.f32.xlu0 %v948
    %v969 = vpop.xlane.xlu0 %968
    %970 = vadd.xlane.f32.xlu0 %v949
    %v971 = vpop.xlane.xlu0 %970
    %972 = vadd.xlane.f32.xlu0 %v950
    %v973 = vpop.xlane.xlu0 %972
    %974 = vadd.xlane.f32.xlu0 %v951
    %v975 = vpop.xlane.xlu0 %974
    %976 = vadd.xlane.f32.xlu0 %v952
    %v977 = vpop.xlane.xlu0 %976
    %978 = vadd.xlane.f32.xlu0 %v953
    %v979 = vpop.xlane.xlu0 %978
    %980 = vadd.xlane.f32.xlu0 %v954
    %v981 = vpop.xlane.xlu0 %980
    %982 = vadd.xlane.f32.xlu0 %v955
    %v983 = vpop.xlane.xlu0 %982
    %984 = vadd.xlane.f32.xlu0 %v956
    %v985 = vpop.xlane.xlu0 %984
    %986 = vadd.xlane.f32.xlu0 %v957
    %v987 = vpop.xlane.xlu0 %986
    %988 = vadd.xlane.f32.xlu0 %v958
    %v989 = vpop.xlane.xlu0 %988
    %990 = vadd.xlane.f32.xlu0 %v959
    %v991 = vpop.xlane.xlu0 %990
    %v992 = vmul.f32 %v961, 0.03125
    %v993 = vmul.f32 %v963, 0.03125
    %v994 = vmul.f32 %v965, 0.03125
    %v995 = vmul.f32 %v967, 0.03125
    %v996 = vmul.f32 %v969, 0.03125
    %v997 = vmul.f32 %v971, 0.03125
    %v998 = vmul.f32 %v973, 0.03125
    %v999 = vmul.f32 %v975, 0.03125
    %v1000 = vmul.f32 %v977, 0.03125
    %v1001 = vmul.f32 %v979, 0.03125
    %v1002 = vmul.f32 %v981, 0.03125
    %v1003 = vmul.f32 %v983, 0.03125
    %v1004 = vmul.f32 %v985, 0.03125
    %v1005 = vmul.f32 %v987, 0.03125
    %v1006 = vmul.f32 %v989, 0.03125
    %v1007 = vmul.f32 %v991, 0.03125
    %v1008 = vadd.f32 %v992, 1e-05
    %v1009 = vadd.f32 %v993, 1e-05
    %v1010 = vadd.f32 %v994, 1e-05
    %v1011 = vadd.f32 %v995, 1e-05
    %v1012 = vadd.f32 %v996, 1e-05
    %v1013 = vadd.f32 %v997, 1e-05
    %v1014 = vadd.f32 %v998, 1e-05
    %v1015 = vadd.f32 %v999, 1e-05
    %v1016 = vadd.f32 %v1000, 1e-05
    %v1017 = vadd.f32 %v1001, 1e-05
    %v1018 = vadd.f32 %v1002, 1e-05
    %v1019 = vadd.f32 %v1003, 1e-05
    %v1020 = vadd.f32 %v1004, 1e-05
    %v1021 = vadd.f32 %v1005, 1e-05
    %v1022 = vadd.f32 %v1006, 1e-05
    %v1023 = vadd.f32 %v1007, 1e-05
    %v1024 = vrsqrt.pop %v1008
    %v1025 = vmul.f32 %v1024, %v1008
    %v1026 = vmul.f32 %v1025, %v1024
    %v1027 = vmul.f32 0.5, %v1026
    %v1028 = vsub.f32 1.5, %v1027
    %v1029 = vmul.f32 %v1024, %v1028
    %vm1030 = vweird.f32 %v1008
    %vm1031 = vweird.f32 %v1024
    %vm1032 = vmor %vm1030, %vm1031
    %v1033 = vsel %vm1032, %v1024, %v1029
    %v1034 = vrsqrt.pop %v1009
    %v1035 = vmul.f32 %v1034, %v1009
    %v1036 = vmul.f32 %v1035, %v1034
    %v1037 = vmul.f32 0.5, %v1036
    %v1038 = vsub.f32 1.5, %v1037
    %v1039 = vmul.f32 %v1034, %v1038
    %vm1040 = vweird.f32 %v1009
    %vm1041 = vweird.f32 %v1034
    %vm1042 = vmor %vm1040, %vm1041
    %v1043 = vsel %vm1042, %v1034, %v1039
    %v1044 = vrsqrt.pop %v1010
    %v1045 = vmul.f32 %v1044, %v1010
    %v1046 = vmul.f32 %v1045, %v1044
    %v1047 = vmul.f32 0.5, %v1046
    %v1048 = vsub.f32 1.5, %v1047
    %v1049 = vmul.f32 %v1044, %v1048
    %vm1050 = vweird.f32 %v1010
    %vm1051 = vweird.f32 %v1044
    %vm1052 = vmor %vm1050, %vm1051
    %v1053 = vsel %vm1052, %v1044, %v1049
    %v1054 = vrsqrt.pop %v1011
    %v1055 = vmul.f32 %v1054, %v1011
    %v1056 = vmul.f32 %v1055, %v1054
    %v1057 = vmul.f32 0.5, %v1056
    %v1058 = vsub.f32 1.5, %v1057
    %v1059 = vmul.f32 %v1054, %v1058
    %vm1060 = vweird.f32 %v1011
    %vm1061 = vweird.f32 %v1054
    %vm1062 = vmor %vm1060, %vm1061
    %v1063 = vsel %vm1062, %v1054, %v1059
    %v1064 = vrsqrt.pop %v1012
    %v1065 = vmul.f32 %v1064, %v1012
    %v1066 = vmul.f32 %v1065, %v1064
    %v1067 = vmul.f32 0.5, %v1066
    %v1068 = vsub.f32 1.5, %v1067
    %v1069 = vmul.f32 %v1064, %v1068
    %vm1070 = vweird.f32 %v1012
    %vm1071 = vweird.f32 %v1064
    %vm1072 = vmor %vm1070, %vm1071
    %v1073 = vsel %vm1072, %v1064, %v1069
    %v1074 = vrsqrt.pop %v1013
    %v1075 = vmul.f32 %v1074, %v1013
    %v1076 = vmul.f32 %v1075, %v1074
    %v1077 = vmul.f32 0.5, %v1076
    %v1078 = vsub.f32 1.5, %v1077
    %v1079 = vmul.f32 %v1074, %v1078
    %vm1080 = vweird.f32 %v1013
    %vm1081 = vweird.f32 %v1074
    %vm1082 = vmor %vm1080, %vm1081
    %v1083 = vsel %vm1082, %v1074, %v1079
    %v1084 = vrsqrt.pop %v1014
    %v1085 = vmul.f32 %v1084, %v1014
    %v1086 = vmul.f32 %v1085, %v1084
    %v1087 = vmul.f32 0.5, %v1086
    %v1088 = vsub.f32 1.5, %v1087
    %v1089 = vmul.f32 %v1084, %v1088
    %vm1090 = vweird.f32 %v1014
    %vm1091 = vweird.f32 %v1084
    %vm1092 = vmor %vm1090, %vm1091
    %v1093 = vsel %vm1092, %v1084, %v1089
    %v1094 = vrsqrt.pop %v1015
    %v1095 = vmul.f32 %v1094, %v1015
    %v1096 = vmul.f32 %v1095, %v1094
    %v1097 = vmul.f32 0.5, %v1096
    %v1098 = vsub.f32 1.5, %v1097
    %v1099 = vmul.f32 %v1094, %v1098
    %vm1100 = vweird.f32 %v1015
    %vm1101 = vweird.f32 %v1094
    %vm1102 = vmor %vm1100, %vm1101
    %v1103 = vsel %vm1102, %v1094, %v1099
    %v1104 = vrsqrt.pop %v1016
    %v1105 = vmul.f32 %v1104, %v1016
    %v1106 = vmul.f32 %v1105, %v1104
    %v1107 = vmul.f32 0.5, %v1106
    %v1108 = vsub.f32 1.5, %v1107
    %v1109 = vmul.f32 %v1104, %v1108
    %vm1110 = vweird.f32 %v1016
    %vm1111 = vweird.f32 %v1104
    %vm1112 = vmor %vm1110, %vm1111
    %v1113 = vsel %vm1112, %v1104, %v1109
    %v1114 = vrsqrt.pop %v1017
    %v1115 = vmul.f32 %v1114, %v1017
    %v1116 = vmul.f32 %v1115, %v1114
    %v1117 = vmul.f32 0.5, %v1116
    %v1118 = vsub.f32 1.5, %v1117
    %v1119 = vmul.f32 %v1114, %v1118
    %vm1120 = vweird.f32 %v1017
    %vm1121 = vweird.f32 %v1114
    %vm1122 = vmor %vm1120, %vm1121
    %v1123 = vsel %vm1122, %v1114, %v1119
    %v1124 = vrsqrt.pop %v1018
    %v1125 = vmul.f32 %v1124, %v1018
    %v1126 = vmul.f32 %v1125, %v1124
    %v1127 = vmul.f32 0.5, %v1126
    %v1128 = vsub.f32 1.5, %v1127
    %v1129 = vmul.f32 %v1124, %v1128
    %vm1130 = vweird.f32 %v1018
    %vm1131 = vweird.f32 %v1124
    %vm1132 = vmor %vm1130, %vm1131
    %v1133 = vsel %vm1132, %v1124, %v1129
    %v1134 = vrsqrt.pop %v1019
    %v1135 = vmul.f32 %v1134, %v1019
    %v1136 = vmul.f32 %v1135, %v1134
    %v1137 = vmul.f32 0.5, %v1136
    %v1138 = vsub.f32 1.5, %v1137
    %v1139 = vmul.f32 %v1134, %v1138
    %vm1140 = vweird.f32 %v1019
    %vm1141 = vweird.f32 %v1134
    %vm1142 = vmor %vm1140, %vm1141
    %v1143 = vsel %vm1142, %v1134, %v1139
    %v1144 = vrsqrt.pop %v1020
    %v1145 = vmul.f32 %v1144, %v1020
    %v1146 = vmul.f32 %v1145, %v1144
    %v1147 = vmul.f32 0.5, %v1146
    %v1148 = vsub.f32 1.5, %v1147
    %v1149 = vmul.f32 %v1144, %v1148
    %vm1150 = vweird.f32 %v1020
    %vm1151 = vweird.f32 %v1144
    %vm1152 = vmor %vm1150, %vm1151
    %v1153 = vsel %vm1152, %v1144, %v1149
    %v1154 = vrsqrt.pop %v1021
    %v1155 = vmul.f32 %v1154, %v1021
    %v1156 = vmul.f32 %v1155, %v1154
    %v1157 = vmul.f32 0.5, %v1156
    %v1158 = vsub.f32 1.5, %v1157
    %v1159 = vmul.f32 %v1154, %v1158
    %vm1160 = vweird.f32 %v1021
    %vm1161 = vweird.f32 %v1154
    %vm1162 = vmor %vm1160, %vm1161
    %v1163 = vsel %vm1162, %v1154, %v1159
    %v1164 = vrsqrt.pop %v1022
    %v1165 = vmul.f32 %v1164, %v1022
    %v1166 = vmul.f32 %v1165, %v1164
    %v1167 = vmul.f32 0.5, %v1166
    %v1168 = vsub.f32 1.5, %v1167
    %v1169 = vmul.f32 %v1164, %v1168
    %vm1170 = vweird.f32 %v1022
    %vm1171 = vweird.f32 %v1164
    %vm1172 = vmor %vm1170, %vm1171
    %v1173 = vsel %vm1172, %v1164, %v1169
    %v1174 = vrsqrt.pop %v1023
    %v1175 = vmul.f32 %v1174, %v1023
    %v1176 = vmul.f32 %v1175, %v1174
    %v1177 = vmul.f32 0.5, %v1176
    %v1178 = vsub.f32 1.5, %v1177
    %v1179 = vmul.f32 %v1174, %v1178
    %vm1180 = vweird.f32 %v1023
    %vm1181 = vweird.f32 %v1174
    %vm1182 = vmor %vm1180, %vm1181
    %v1183 = vsel %vm1182, %v1174, %v1179
    %v1184 = vmul.f32 %v928, %v1033
    %v1185 = vmul.f32 %v929, %v1043
    %v1186 = vmul.f32 %v930, %v1053
    %v1187 = vmul.f32 %v931, %v1063
    %v1188 = vmul.f32 %v932, %v1073
    %v1189 = vmul.f32 %v933, %v1083
    %v1190 = vmul.f32 %v934, %v1093
    %v1191 = vmul.f32 %v935, %v1103
    %v1192 = vmul.f32 %v936, %v1113
    %v1193 = vmul.f32 %v937, %v1123
    %v1194 = vmul.f32 %v938, %v1133
    %v1195 = vmul.f32 %v939, %v1143
    %v1196 = vmul.f32 %v940, %v1153
    %v1197 = vmul.f32 %v941, %v1163
    %v1198 = vmul.f32 %v942, %v1173
    %v1199 = vmul.f32 %v943, %v1183
    %v1200 = vperm.slane %v86, 0
    %v1201 = vmul.f32 %v1184, %v1200
    %v1202 = vmul.f32 %v1185, %v1200
    %v1203 = vmul.f32 %v1186, %v1200
    %v1204 = vmul.f32 %v1187, %v1200
    %v1205 = vmul.f32 %v1188, %v1200
    %v1206 = vmul.f32 %v1189, %v1200
    %v1207 = vmul.f32 %v1190, %v1200
    %v1208 = vmul.f32 %v1191, %v1200
    %v1209 = vmul.f32 %v1192, %v1200
    %v1210 = vmul.f32 %v1193, %v1200
    %v1211 = vmul.f32 %v1194, %v1200
    %v1212 = vmul.f32 %v1195, %v1200
    %v1213 = vmul.f32 %v1196, %v1200
    %v1214 = vmul.f32 %v1197, %v1200
    %v1215 = vmul.f32 %v1198, %v1200
    %v1216 = vmul.f32 %v1199, %v1200
    %v1217 = vperm.slane %v87, 0
    %v1218 = vadd.f32 %v1201, %v1217
    %v1219 = vadd.f32 %v1202, %v1217
    %v1220 = vadd.f32 %v1203, %v1217
    %v1221 = vadd.f32 %v1204, %v1217
    %v1222 = vadd.f32 %v1205, %v1217
    %v1223 = vadd.f32 %v1206, %v1217
    %v1224 = vadd.f32 %v1207, %v1217
    %v1225 = vadd.f32 %v1208, %v1217
    %v1226 = vadd.f32 %v1209, %v1217
    %v1227 = vadd.f32 %v1210, %v1217
    %v1228 = vadd.f32 %v1211, %v1217
    %v1229 = vadd.f32 %v1212, %v1217
    %v1230 = vadd.f32 %v1213, %v1217
    %v1231 = vadd.f32 %v1214, %v1217
    %v1232 = vadd.f32 %v1215, %v1217
    %v1233 = vadd.f32 %v1216, %v1217
    %v1234 = vadd.f32 %v1218, %v88
    %v1235 = vadd.f32 %v1219, %v89
    %v1236 = vadd.f32 %v1220, %v90
    %v1237 = vadd.f32 %v1221, %v91
    %v1238 = vadd.f32 %v1222, %v92
    %v1239 = vadd.f32 %v1223, %v93
    %v1240 = vadd.f32 %v1224, %v94
    %v1241 = vadd.f32 %v1225, %v95
    %v1242 = vadd.f32 %v1226, %v96
    %v1243 = vadd.f32 %v1227, %v97
    %v1244 = vadd.f32 %v1228, %v98
    %v1245 = vadd.f32 %v1229, %v99
    %v1246 = vadd.f32 %v1230, %v100
    %v1247 = vadd.f32 %v1231, %v101
    %v1248 = vadd.f32 %v1232, %v102
    %v1249 = vadd.f32 %v1233, %v103
    %v1250 = vmul.f32 %v1234, 0.5
    %v1251 = vmul.f32 %v1235, 0.5
    %v1252 = vmul.f32 %v1236, 0.5
    %v1253 = vmul.f32 %v1237, 0.5
    %v1254 = vmul.f32 %v1238, 0.5
    %v1255 = vmul.f32 %v1239, 0.5
    %v1256 = vmul.f32 %v1240, 0.5
    %v1257 = vmul.f32 %v1241, 0.5
    %v1258 = vmul.f32 %v1242, 0.5
    %v1259 = vmul.f32 %v1243, 0.5
    %v1260 = vmul.f32 %v1244, 0.5
    %v1261 = vmul.f32 %v1245, 0.5
    %v1262 = vmul.f32 %v1246, 0.5
    %v1263 = vmul.f32 %v1247, 0.5
    %v1264 = vmul.f32 %v1248, 0.5
    %v1265 = vmul.f32 %v1249, 0.5
    %v1266 = vmul.f32 %v1234, 0.044715
    %v1267 = vmul.f32 %v1235, 0.044715
    %v1268 = vmul.f32 %v1236, 0.044715
    %v1269 = vmul.f32 %v1237, 0.044715
    %v1270 = vmul.f32 %v1238, 0.044715
    %v1271 = vmul.f32 %v1239, 0.044715
    %v1272 = vmul.f32 %v1240, 0.044715
    %v1273 = vmul.f32 %v1241, 0.044715
    %v1274 = vmul.f32 %v1242, 0.044715
    %v1275 = vmul.f32 %v1243, 0.044715
    %v1276 = vmul.f32 %v1244, 0.044715
    %v1277 = vmul.f32 %v1245, 0.044715
    %v1278 = vmul.f32 %v1246, 0.044715
    %v1279 = vmul.f32 %v1247, 0.044715
    %v1280 = vmul.f32 %v1248, 0.044715
    %v1281 = vmul.f32 %v1249, 0.044715
    %v1282 = vmul.f32 %v1266, %v1234
    %v1283 = vmul.f32 %v1267, %v1235
    %v1284 = vmul.f32 %v1268, %v1236
    %v1285 = vmul.f32 %v1269, %v1237
    %v1286 = vmul.f32 %v1270, %v1238
    %v1287 = vmul.f32 %v1271, %v1239
    %v1288 = vmul.f32 %v1272, %v1240
    %v1289 = vmul.f32 %v1273, %v1241
    %v1290 = vmul.f32 %v1274, %v1242
    %v1291 = vmul.f32 %v1275, %v1243
    %v1292 = vmul.f32 %v1276, %v1244
    %v1293 = vmul.f32 %v1277, %v1245
    %v1294 = vmul.f32 %v1278, %v1246
    %v1295 = vmul.f32 %v1279, %v1247
    %v1296 = vmul.f32 %v1280, %v1248
    %v1297 = vmul.f32 %v1281, %v1249
    %v1298 = vmul.f32 %v1282, %v1234
    %v1299 = vmul.f32 %v1283, %v1235
    %v1300 = vmul.f32 %v1284, %v1236
    %v1301 = vmul.f32 %v1285, %v1237
    %v1302 = vmul.f32 %v1286, %v1238
    %v1303 = vmul.f32 %v1287, %v1239
    %v1304 = vmul.f32 %v1288, %v1240
    %v1305 = vmul.f32 %v1289, %v1241
    %v1306 = vmul.f32 %v1290, %v1242
    %v1307 = vmul.f32 %v1291, %v1243
    %v1308 = vmul.f32 %v1292, %v1244
    %v1309 = vmul.f32 %v1293, %v1245
    %v1310 = vmul.f32 %v1294, %v1246
    %v1311 = vmul.f32 %v1295, %v1247
    %v1312 = vmul.f32 %v1296, %v1248
    %v1313 = vmul.f32 %v1297, %v1249
    %v1314 = vadd.f32 %v1234, %v1298
    %v1315 = vadd.f32 %v1235, %v1299
    %v1316 = vadd.f32 %v1236, %v1300
    %v1317 = vadd.f32 %v1237, %v1301
    %v1318 = vadd.f32 %v1238, %v1302
    %v1319 = vadd.f32 %v1239, %v1303
    %v1320 = vadd.f32 %v1240, %v1304
    %v1321 = vadd.f32 %v1241, %v1305
    %v1322 = vadd.f32 %v1242, %v1306
    %v1323 = vadd.f32 %v1243, %v1307
    %v1324 = vadd.f32 %v1244, %v1308
    %v1325 = vadd.f32 %v1245, %v1309
    %v1326 = vadd.f32 %v1246, %v1310
    %v1327 = vadd.f32 %v1247, %v1311
    %v1328 = vadd.f32 %v1248, %v1312
    %v1329 = vadd.f32 %v1249, %v1313
    %v1330 = vmul.f32 %v1314, 0.7978846
    %v1331 = vmul.f32 %v1315, 0.7978846
    %v1332 = vmul.f32 %v1316, 0.7978846
    %v1333 = vmul.f32 %v1317, 0.7978846
    %v1334 = vmul.f32 %v1318, 0.7978846
    %v1335 = vmul.f32 %v1319, 0.7978846
    %v1336 = vmul.f32 %v1320, 0.7978846
    %v1337 = vmul.f32 %v1321, 0.7978846
    %v1338 = vmul.f32 %v1322, 0.7978846
    %v1339 = vmul.f32 %v1323, 0.7978846
    %v1340 = vmul.f32 %v1324, 0.7978846
    %v1341 = vmul.f32 %v1325, 0.7978846
    %v1342 = vmul.f32 %v1326, 0.7978846
    %v1343 = vmul.f32 %v1327, 0.7978846
    %v1344 = vmul.f32 %v1328, 0.7978846
    %v1345 = vmul.f32 %v1329, 0.7978846
    %v1346 = vtanh.pop %v1330
    %v1347 = vtanh.pop %v1331
    %v1348 = vtanh.pop %v1332
    %v1349 = vtanh.pop %v1333
    %v1350 = vtanh.pop %v1334
    %v1351 = vtanh.pop %v1335
    %v1352 = vtanh.pop %v1336
    %v1353 = vtanh.pop %v1337
    %v1354 = vtanh.pop %v1338
    %v1355 = vtanh.pop %v1339
    %v1356 = vtanh.pop %v1340
    %v1357 = vtanh.pop %v1341
    %v1358 = vtanh.pop %v1342
    %v1359 = vtanh.pop %v1343
    %v1360 = vtanh.pop %v1344
    %v1361 = vtanh.pop %v1345
    %v1362 = vadd.f32 %v1346, 1.0
    %v1363 = vadd.f32 %v1347, 1.0
    %v1364 = vadd.f32 %v1348, 1.0
    %v1365 = vadd.f32 %v1349, 1.0
    %v1366 = vadd.f32 %v1350, 1.0
    %v1367 = vadd.f32 %v1351, 1.0
    %v1368 = vadd.f32 %v1352, 1.0
    %v1369 = vadd.f32 %v1353, 1.0
    %v1370 = vadd.f32 %v1354, 1.0
    %v1371 = vadd.f32 %v1355, 1.0
    %v1372 = vadd.f32 %v1356, 1.0
    %v1373 = vadd.f32 %v1357, 1.0
    %v1374 = vadd.f32 %v1358, 1.0
    %v1375 = vadd.f32 %v1359, 1.0
    %v1376 = vadd.f32 %v1360, 1.0
    %v1377 = vadd.f32 %v1361, 1.0
    %v1378 = vmul.f32 %v1250, %v1362
    %v1379 = vmul.f32 %v1251, %v1363
    %v1380 = vmul.f32 %v1252, %v1364
    %v1381 = vmul.f32 %v1253, %v1365
    %v1382 = vmul.f32 %v1254, %v1366
    %v1383 = vmul.f32 %v1255, %v1367
    %v1384 = vmul.f32 %v1256, %v1368
    %v1385 = vmul.f32 %v1257, %v1369
    %v1386 = vmul.f32 %v1258, %v1370
    %v1387 = vmul.f32 %v1259, %v1371
    %v1388 = vmul.f32 %v1260, %v1372
    %v1389 = vmul.f32 %v1261, %v1373
    %v1390 = vmul.f32 %v1262, %v1374
    %v1391 = vmul.f32 %v1263, %v1375
    %v1392 = vmul.f32 %v1264, %v1376
    %v1393 = vmul.f32 %v1265, %v1377
    %1394 = vst [vmem:[#allocation10] sm:$0xff] %v1378
    %1395 = vst [vmem:[#allocation10 + $0x8] sm:$0xff] %v1379
    %1396 = vst [vmem:[#allocation10 + $0x10] sm:$0xff] %v1380
    %1397 = vst [vmem:[#allocation10 + $0x18] sm:$0xff] %v1381
    %1398 = vst [vmem:[#allocation10 + $0x20] sm:$0xff] %v1382
    %1399 = vst [vmem:[#allocation10 + $0x28] sm:$0xff] %v1383
    %1400 = vst [vmem:[#allocation10 + $0x30] sm:$0xff] %v1384
    %1401 = vst [vmem:[#allocation10 + $0x38] sm:$0xff] %v1385
    %1402 = vst [vmem:[#allocation10 + $0x40] sm:$0xff] %v1386
    %1403 = vst [vmem:[#allocation10 + $0x48] sm:$0xff] %v1387
    %1404 = vst [vmem:[#allocation10 + $0x50] sm:$0xff] %v1388
    %1405 = vst [vmem:[#allocation10 + $0x58] sm:$0xff] %v1389
    %1406 = vst [vmem:[#allocation10 + $0x60] sm:$0xff] %v1390
    %1407 = vst [vmem:[#allocation10 + $0x68] sm:$0xff] %v1391
    %1408 = vst [vmem:[#allocation10 + $0x70] sm:$0xff] %v1392
    %1409 = vst [vmem:[#allocation10 + $0x78] sm:$0xff] %v1393
    // Predicated region
    $region34: #{tpu_custom_call.1} parent=1 // pred_check
      _
    $region35: #{tpu_custom_call.1} parent=1 // pred_check_branch
      %1411 = sbr.rel (0) target = $region37
    $region36: #{tpu_custom_call.1} parent=1 // pred_region
      %1413 = vsyncadd [#allocation4], 0
      %s1414 = sshll.u32 [#allocation10], 4
      %s1415 = int_to_ptr.vmem [resolvable:$true] %s1414
      %s1416 = sshll.u32 %s4, 4
      %s1417 = int_to_ptr.hbm [resolvable:$true] %s1416
      %1422 = dma.vmem_to_hbm [thread:$0]  %s1415, 2048, %s1417, [#allocation4], 128, 128, 8
    $region37: #{tpu_custom_call.1} parent=1 // pred_fallthru
      _
    // Predicated region
    $region38: #{tpu_custom_call.1} parent=1 // pred_check
      _
    $region39: #{tpu_custom_call.1} parent=1 // pred_check_branch
      %1424 = sbr.rel (0) target = $region41
    $region40: #{tpu_custom_call.1} parent=1 // pred_region
      %1426 = dma.done [#allocation4], 2048
    $region41: #{tpu_custom_call.1} parent=1 // pred_fallthru
      _
    %1427 = vsyncpa [#allocation3], 1
    %1428 = vsyncpa [#allocation6], 1
    %1429 = vsyncpa [#allocation9], 1
    %1430 = vsyncpa [#allocation4], 1

</llo_original>
